<compile_context>
chip_gen: v6e
topology: v6e:2x2x1
jax: 0.10.0
libtpu: 0.0.40
codegen_flags: <defaults>
</compile_context>

<pallas_src>
import jax
import jax.numpy as jnp
from jax.experimental import pallas as pl
from jax.experimental.pallas import tpu as pltpu

EPS = 1e-5


def make_densenet_kernel(N, W, C0, G, L, fs, C_total):
    pad = (fs - 1) // 2
    NW = N * W

    def kernel(x_ref, gamma_ref, beta_ref, w_ref, bias_ref, out_ref, xn_ref):
        # (NW, 1) boundary-validity masks, one per nonzero tap offset: implements the
        # zero 'same' padding at every width-W segment edge and kills roll wrap-around
        # between batch rows.  Applied to the (NW, G) tap output, not the input.
        pos = jax.lax.broadcasted_iota(jnp.int32, (NW, 1), 0) % W
        masks = {}
        for k in range(fs):
            off = k - pad
            if off == 0:
                continue
            valid = jnp.logical_and(pos + off >= 0, pos + off < W)
            masks[off] = valid.astype(jnp.float32)

        def relu_max_store(piece, c_off, c):
            # final ReLU + max over W per batch row: one reshaped reduction and one
            # piece-wide store into the VMEM-resident output block (written back to
            # HBM once, lane-dense, when the kernel finishes).
            r = jnp.maximum(piece, 0.0)
            m = jnp.max(r.reshape(N, W, c), axis=1)          # (N, c)
            out_ref[:, pl.ds(c_off, c)] = m

        # ---- input piece: BN stats computed once; normalized features cached ----
        x0 = x_ref[...]                                      # (NW, C0), un-padded
        mu = jnp.mean(x0, axis=0, keepdims=True)
        var = jnp.mean((x0 - mu) ** 2, axis=0, keepdims=True)
        xn_ref[:, pl.ds(0, C0)] = (x0 - mu) * jax.lax.rsqrt(var + EPS)
        # explicitly zero the future-piece channels (scratch VMEM is uninitialized;
        # later layers read the full width through gamma=1/beta=0 padding).
        if C_total > C0:
            xn_ref[:, pl.ds(C0, C_total - C0)] = jnp.zeros(
                (NW, C_total - C0), jnp.float32)
        relu_max_store(x0, 0, C0)

        # ---- dense layers (statically unrolled) ----
        # TODO(synk): for large L / C_total, move this loop onto grid=(L,) with
        #   per-layer weight BlockSpecs (pipelines weight DMA, bounds VMEM on v7x);
        #   deferred because the feature-cache / output writes would then need
        #   dynamic lane offsets (or a channel-on-sublane transposed cache).
        for l in range(L):
            g = gamma_ref[pl.ds(l, 1), :]                    # (1, C_total), padded 1
            b = beta_ref[pl.ds(l, 1), :]                     # (1, C_total), padded 0
            # BN affine + ReLU on cached normalized features (f32 elementwise, VPU)
            y = jnp.maximum(xn_ref[...] * g + b, 0.0)        # (NW, C_total)
            y_bf = y.astype(jnp.bfloat16)                    # single cast per layer
            acc = jnp.zeros((NW, G), jnp.float32)
            for k in range(fs):
                off = k - pad
                # full-K matmul of the UNSHIFTED activations (bf16 in, f32 acc, MXU);
                # the W-shift and boundary mask act on the small (NW, G) tap output.
                z = jnp.dot(y_bf, w_ref[l * fs + k],
                            preferred_element_type=jnp.float32)
                if off != 0:
                    z = pltpu.roll(z, shift=(-off) % NW, axis=0) * masks[off]
                acc = acc + z
            new = acc + bias_ref[pl.ds(l, 1), :]             # (NW, G)
            # cache the new piece's normalized features for all later layers
            mu_n = jnp.mean(new, axis=0, keepdims=True)
            var_n = jnp.mean((new - mu_n) ** 2, axis=0, keepdims=True)
            c_off = C0 + l * G
            xn_ref[:, pl.ds(c_off, G)] = (new - mu_n) * jax.lax.rsqrt(var_n + EPS)
            relu_max_store(new, c_off, G)

    return kernel


def densenet_forward(topic, params, *, num_layers, growth_rate, filter_size):
    """topic: (N, C0, W) float32 — PyTorch NCW (the module unsqueezes H=1 itself)."""
    N, C0, W = topic.shape
    G, L, fs = growth_rate, num_layers, filter_size
    NW = N * W
    C_total = C0 + L * G

    # glue: NCW -> (N*W, C0), channels on lanes; no channel padding on the input.
    x2d = jnp.transpose(topic, (0, 2, 1)).reshape(NW, C0)

    # pack parameters into a few contiguous slabs (padded along channels)
    gamma_pack = jnp.ones((L, C_total), jnp.float32)
    beta_pack = jnp.zeros((L, C_total), jnp.float32)
    w_pack = jnp.zeros((L, fs, C_total, G), jnp.float32)
    bias_pack = jnp.zeros((L, G), jnp.float32)
    for l in range(L):
        gamma, beta, wconv, bias = params[l]          # (C_l,), (C_l,), (G, C_l, 1, fs), (G,)
        C_l = C0 + l * G
        gamma_pack = gamma_pack.at[l, :C_l].set(gamma)
        beta_pack = beta_pack.at[l, :C_l].set(beta)
        # w_pack[l, k, c, g] = wconv[g, c, 0, k]
        w_pack = w_pack.at[l, :, :C_l, :].set(jnp.transpose(wconv[:, :, 0, :], (2, 1, 0)))
        bias_pack = bias_pack.at[l].set(bias)
    # TODO(synk): once C_total >> 128, lay each layer's slab out at a 128-aligned K
    #   start and slice the dot's K extent to the live channels (avoid dead-K MXU work).
    w_pack = w_pack.reshape(L * fs, C_total, G).astype(jnp.bfloat16)

    kernel = make_densenet_kernel(N, W, C0, G, L, fs, C_total)
    # TODO(synk): for large N*W, tile rows over a parallel grid axis (second v7x
    #   TensorCore); batch-norm statistics couple all rows, so that needs a two-pass
    #   reduction.  A bf16 xn cache would also halve VMEM on v7x.
    out = pl.pallas_call(
        kernel,
        out_shape=jax.ShapeDtypeStruct((N, C_total), jnp.float32),
        in_specs=[pl.BlockSpec(memory_space=pltpu.MemorySpace.VMEM)] * 5,
        out_specs=pl.BlockSpec(memory_space=pltpu.MemorySpace.VMEM),
        scratch_shapes=[pltpu.VMEM((NW, C_total), jnp.float32)],
        compiler_params=pltpu.CompilerParams(vmem_limit_bytes=32 * 1024 * 1024),
    )(x2d, gamma_pack, beta_pack, w_pack, bias_pack)
    return out


def densenet_ref(topic, params, *, num_layers, growth_rate, filter_size):
    """Pure-JAX reference following the PyTorch forward exactly."""
    pad = (filter_size - 1) // 2
    feats = topic[:, :, None, :]  # NCHW with H=1
    for l in range(num_layers):
        gamma, beta, w, b = params[l]
        mean = feats.mean(axis=(0, 2, 3), keepdims=True)
        var = ((feats - mean) ** 2).mean(axis=(0, 2, 3), keepdims=True)
        xn = (feats - mean) / jnp.sqrt(var + EPS)
        xn = xn * gamma[None, :, None, None] + beta[None, :, None, None]
        xr = jnp.maximum(xn, 0.0)
        new = jax.lax.conv_general_dilated(
            xr, w, window_strides=(1, 1), padding=((0, 0), (pad, pad)),
            dimension_numbers=("NCHW", "OIHW", "NCHW"))
        new = new + b[None, :, None, None]
        feats = jnp.concatenate([feats, new], axis=1)
    feats = jnp.maximum(feats, 0.0)
    return jnp.max(feats[:, :, 0, :], axis=2)


def init_params(key, C0, L, G, fs):
    params = []
    c = C0
    for _l in range(L):
        key, k1, k2, k3, k4 = jax.random.split(key, 5)
        gamma = 1.0 + 0.1 * jax.random.normal(k1, (c,), jnp.float32)
        beta = 0.1 * jax.random.normal(k2, (c,), jnp.float32)
        wconv = jax.random.normal(k3, (G, c, 1, fs), jnp.float32) / jnp.sqrt(c * fs)
        bias = 0.1 * jax.random.normal(k4, (G,), jnp.float32)
        params.append((gamma, beta, wconv, bias))
        c += G
    return params


if __name__ == "__main__":
    N, C0, W = 2, 4, 16          # batch, num_input_filters, sequence width
    L, G, fs = 3, 4, 3           # num_layers, growth_rate, filter_size

    key = jax.random.PRNGKey(0)
    kx, kp = jax.random.split(key)
    topic = jax.random.normal(kx, (N, C0, W), jnp.float32)
    params = init_params(kp, C0, L, G, fs)

    out = densenet_forward(topic, params, num_layers=L, growth_rate=G,
                           filter_size=fs)
    out = jax.block_until_ready(out)

    ref = densenet_ref(topic, params, num_layers=L, growth_rate=G,
                       filter_size=fs)
    ref = jax.block_until_ready(ref)

    assert out.shape == (N, C0 + L * G), out.shape
    assert jnp.allclose(out, ref, rtol=3e-2, atol=3e-2), (
        "mismatch vs pure-JAX reference")
    print("KERNEL_OK")
</pallas_src>

<mosaic_0001>
module attributes {stable_mosaic.version = 11 : i64} {
  func.func @kernel(%arg0: memref<32x4xf32, #tpu.memory_space<vmem>>, %arg1: memref<3x16xf32, #tpu.memory_space<vmem>>, %arg2: memref<3x16xf32, #tpu.memory_space<vmem>>, %arg3: memref<9x16x4xbf16, #tpu.memory_space<vmem>>, %arg4: memref<3x4xf32, #tpu.memory_space<vmem>>, %arg5: memref<2x16xf32, #tpu.memory_space<vmem>>, %arg6: memref<32x16xf32, #tpu.memory_space<vmem>>) attributes {dimension_semantics = [], scalar_prefetch = 0 : i64, scratch_operands = 1 : i64, tpu.core_type = #tpu.core_type<tc>} {
    %0 = tpu.iota {dimensions = array<i32: 0>} : vector<32x1xi32>
    %c16_i32 = arith.constant 16 : i32
    %c0_i32 = arith.constant 0 : i32
    %1 = arith.cmpi eq, %c16_i32, %c0_i32 : i32
    %c1_i32 = arith.constant 1 : i32
    %2 = arith.select %1, %c1_i32, %c16_i32 : i32
    %3 = vector.broadcast %2 : i32 to vector<32x1xi32>
    %4 = arith.remsi %0, %3 : vector<32x1xi32>
    %c0_i32_0 = arith.constant 0 : i32
    %5 = vector.broadcast %c0_i32_0 : i32 to vector<32x1xi32>
    %6 = arith.cmpi ne, %4, %5 : vector<32x1xi32>
    %c0_i32_1 = arith.constant 0 : i32
    %7 = vector.broadcast %c0_i32_1 : i32 to vector<32x1xi32>
    %8 = arith.cmpi slt, %4, %7 : vector<32x1xi32>
    %c0_i32_2 = arith.constant 0 : i32
    %9 = arith.cmpi slt, %2, %c0_i32_2 : i32
    %10 = vector.broadcast %9 : i1 to vector<32x1xi1>
    %11 = vector.broadcast %10 : vector<32x1xi1> to vector<32x1xi1>
    %12 = arith.xori %8, %11 : vector<32x1xi1>
    %13 = arith.andi %12, %6 : vector<32x1xi1>
    %14 = vector.broadcast %2 : i32 to vector<32x1xi32>
    %15 = arith.addi %4, %14 : vector<32x1xi32>
    %16 = arith.select %13, %15, %4 : vector<32x1xi1>, vector<32x1xi32>
    %c-1_i32 = arith.constant -1 : i32
    %17 = vector.broadcast %c-1_i32 : i32 to vector<32x1xi32>
    %18 = arith.addi %16, %17 : vector<32x1xi32>
    %c0_i32_3 = arith.constant 0 : i32
    %19 = vector.broadcast %c0_i32_3 : i32 to vector<32x1xi32>
    %20 = arith.cmpi sge, %18, %19 : vector<32x1xi32>
    %c-1_i32_4 = arith.constant -1 : i32
    %21 = vector.broadcast %c-1_i32_4 : i32 to vector<32x1xi32>
    %22 = arith.addi %16, %21 : vector<32x1xi32>
    %c16_i32_5 = arith.constant 16 : i32
    %23 = vector.broadcast %c16_i32_5 : i32 to vector<32x1xi32>
    %24 = arith.cmpi slt, %22, %23 : vector<32x1xi32>
    %25 = arith.andi %20, %24 : vector<32x1xi1>
    %26 = arith.extui %25 : vector<32x1xi1> to vector<32x1xi32>
    %27 = arith.sitofp %26 : vector<32x1xi32> to vector<32x1xf32>
    %c1_i32_6 = arith.constant 1 : i32
    %28 = vector.broadcast %c1_i32_6 : i32 to vector<32x1xi32>
    %29 = arith.addi %16, %28 : vector<32x1xi32>
    %c0_i32_7 = arith.constant 0 : i32
    %30 = vector.broadcast %c0_i32_7 : i32 to vector<32x1xi32>
    %31 = arith.cmpi sge, %29, %30 : vector<32x1xi32>
    %c1_i32_8 = arith.constant 1 : i32
    %32 = vector.broadcast %c1_i32_8 : i32 to vector<32x1xi32>
    %33 = arith.addi %16, %32 : vector<32x1xi32>
    %c16_i32_9 = arith.constant 16 : i32
    %34 = vector.broadcast %c16_i32_9 : i32 to vector<32x1xi32>
    %35 = arith.cmpi slt, %33, %34 : vector<32x1xi32>
    %36 = arith.andi %31, %35 : vector<32x1xi1>
    %37 = arith.extui %36 : vector<32x1xi1> to vector<32x1xi32>
    %38 = arith.sitofp %37 : vector<32x1xi32> to vector<32x1xf32>
    %c0 = arith.constant 0 : index
    %c0_10 = arith.constant 0 : index
    %39 = vector.load %arg0[%c0, %c0_10] : memref<32x4xf32, #tpu.memory_space<vmem>>, vector<32x4xf32>
    %cst = arith.constant dense<0.000000e+00> : vector<4xf32>
    %40 = vector.multi_reduction <add>, %39, %cst [0] : vector<32x4xf32> to vector<4xf32>
    %41 = vector.shape_cast %40 : vector<4xf32> to vector<1x4xf32>
    %cst_11 = arith.constant 3.200000e+01 : f32
    %42 = vector.broadcast %cst_11 : f32 to vector<1x4xf32>
    %43 = arith.divf %41, %42 : vector<1x4xf32>
    %44 = vector.broadcast %43 : vector<1x4xf32> to vector<32x4xf32>
    %45 = arith.subf %39, %44 : vector<32x4xf32>
    %46 = arith.mulf %45, %45 : vector<32x4xf32>
    %cst_12 = arith.constant dense<0.000000e+00> : vector<4xf32>
    %47 = vector.multi_reduction <add>, %46, %cst_12 [0] : vector<32x4xf32> to vector<4xf32>
    %48 = vector.shape_cast %47 : vector<4xf32> to vector<1x4xf32>
    %cst_13 = arith.constant 3.200000e+01 : f32
    %49 = vector.broadcast %cst_13 : f32 to vector<1x4xf32>
    %50 = arith.divf %48, %49 : vector<1x4xf32>
    %51 = vector.broadcast %43 : vector<1x4xf32> to vector<32x4xf32>
    %52 = arith.subf %39, %51 : vector<32x4xf32>
    %cst_14 = arith.constant 9.99999974E-6 : f32
    %53 = vector.broadcast %cst_14 : f32 to vector<1x4xf32>
    %54 = arith.addf %50, %53 : vector<1x4xf32>
    %55 = math.rsqrt %54 : vector<1x4xf32>
    %56 = vector.broadcast %55 : vector<1x4xf32> to vector<32x4xf32>
    %57 = arith.mulf %52, %56 : vector<32x4xf32>
    %c0_15 = arith.constant 0 : index
    %c0_16 = arith.constant 0 : index
    %58 = vector.load %arg6[%c0_15, %c0_16] : memref<32x16xf32, #tpu.memory_space<vmem>>, vector<32x4xf32>
    tpu.vector_store %arg6[%c0_15, %c0_16], %57 {strides = array<i32>} : memref<32x16xf32, #tpu.memory_space<vmem>>, vector<32x4xf32>,
    %cst_17 = arith.constant 0.000000e+00 : f32
    %59 = vector.broadcast %cst_17 : f32 to vector<32x12xf32>
    %c0_18 = arith.constant 0 : index
    %c4 = arith.constant 4 : index
    %60 = vector.load %arg6[%c0_18, %c4] : memref<32x16xf32, #tpu.memory_space<vmem>>, vector<32x12xf32>
    tpu.vector_store %arg6[%c0_18, %c4], %59 {strides = array<i32>} : memref<32x16xf32, #tpu.memory_space<vmem>>, vector<32x12xf32>,
    %cst_19 = arith.constant 0.000000e+00 : f32
    %61 = vector.broadcast %cst_19 : f32 to vector<32x4xf32>
    %62 = arith.maximumf %39, %61 : vector<32x4xf32>
    %63 = vector.shape_cast %62 : vector<32x4xf32> to vector<2x16x4xf32>
    %cst_20 = arith.constant dense<0xFF800000> : vector<2x4xf32>
    %64 = vector.multi_reduction <maximumf>, %63, %cst_20 [1] : vector<2x16x4xf32> to vector<2x4xf32>
    %c0_21 = arith.constant 0 : index
    %c0_22 = arith.constant 0 : index
    %65 = vector.load %arg5[%c0_21, %c0_22] : memref<2x16xf32, #tpu.memory_space<vmem>>, vector<2x4xf32>
    tpu.vector_store %arg5[%c0_21, %c0_22], %64 {strides = array<i32>} : memref<2x16xf32, #tpu.memory_space<vmem>>, vector<2x4xf32>,
    %c0_23 = arith.constant 0 : index
    %c0_24 = arith.constant 0 : index
    %66 = vector.load %arg1[%c0_23, %c0_24] : memref<3x16xf32, #tpu.memory_space<vmem>>, vector<1x16xf32>
    %c0_25 = arith.constant 0 : index
    %c0_26 = arith.constant 0 : index
    %67 = vector.load %arg2[%c0_25, %c0_26] : memref<3x16xf32, #tpu.memory_space<vmem>>, vector<1x16xf32>
    %c0_27 = arith.constant 0 : index
    %c0_28 = arith.constant 0 : index
    %68 = vector.load %arg6[%c0_27, %c0_28] : memref<32x16xf32, #tpu.memory_space<vmem>>, vector<32x16xf32>
    %69 = vector.broadcast %66 : vector<1x16xf32> to vector<32x16xf32>
    %70 = arith.mulf %68, %69 : vector<32x16xf32>
    %71 = vector.broadcast %67 : vector<1x16xf32> to vector<32x16xf32>
    %72 = arith.addf %70, %71 : vector<32x16xf32>
    %cst_29 = arith.constant 0.000000e+00 : f32
    %73 = vector.broadcast %cst_29 : f32 to vector<32x16xf32>
    %74 = arith.maximumf %72, %73 : vector<32x16xf32>
    %75 = arith.truncf %74 : vector<32x16xf32> to vector<32x16xbf16>
    %cst_30 = arith.constant 0.000000e+00 : f32
    %76 = vector.broadcast %cst_30 : f32 to vector<32x4xf32>
    %c0_31 = arith.constant 0 : index
    %c0_32 = arith.constant 0 : index
    %c0_33 = arith.constant 0 : index
    %77 = vector.load %arg3[%c0_31, %c0_32, %c0_33] : memref<9x16x4xbf16, #tpu.memory_space<vmem>>, vector<1x16x4xbf16>
    %78 = vector.shape_cast %77 : vector<1x16x4xbf16> to vector<16x4xbf16>
    %cst_34 = arith.constant dense<0.000000e+00> : vector<32x4xf32>
    %79 = tpu.matmul %75, %78, %cst_34 {dimension_numbers = #tpu.dot_dimension_numbers<[1], [0], [0], [1], [0, 0, 1, 1], [], []>} : vector<32x16xbf16>, vector<16x4xbf16>, vector<32x4xf32> -> vector<32x4xf32>
    %c1_i32_35 = arith.constant 1 : i32
    %80 = tpu.dynamic_rotate %79 by %c1_i32_35 dim 0 : vector<32x4xf32>, i32 -> vector<32x4xf32>
    %81 = vector.broadcast %27 : vector<32x1xf32> to vector<32x4xf32>
    %82 = arith.mulf %80, %81 : vector<32x4xf32>
    %83 = arith.addf %76, %82 : vector<32x4xf32>
    %c1 = arith.constant 1 : index
    %c0_36 = arith.constant 0 : index
    %c0_37 = arith.constant 0 : index
    %84 = vector.load %arg3[%c1, %c0_36, %c0_37] : memref<9x16x4xbf16, #tpu.memory_space<vmem>>, vector<1x16x4xbf16>
    %85 = vector.shape_cast %84 : vector<1x16x4xbf16> to vector<16x4xbf16>
    %cst_38 = arith.constant dense<0.000000e+00> : vector<32x4xf32>
    %86 = tpu.matmul %75, %85, %cst_38 {dimension_numbers = #tpu.dot_dimension_numbers<[1], [0], [0], [1], [0, 0, 1, 1], [], []>} : vector<32x16xbf16>, vector<16x4xbf16>, vector<32x4xf32> -> vector<32x4xf32>
    %87 = arith.addf %83, %86 : vector<32x4xf32>
    %c2 = arith.constant 2 : index
    %c0_39 = arith.constant 0 : index
    %c0_40 = arith.constant 0 : index
    %88 = vector.load %arg3[%c2, %c0_39, %c0_40] : memref<9x16x4xbf16, #tpu.memory_space<vmem>>, vector<1x16x4xbf16>
    %89 = vector.shape_cast %88 : vector<1x16x4xbf16> to vector<16x4xbf16>
    %cst_41 = arith.constant dense<0.000000e+00> : vector<32x4xf32>
    %90 = tpu.matmul %75, %89, %cst_41 {dimension_numbers = #tpu.dot_dimension_numbers<[1], [0], [0], [1], [0, 0, 1, 1], [], []>} : vector<32x16xbf16>, vector<16x4xbf16>, vector<32x4xf32> -> vector<32x4xf32>
    %c31_i32 = arith.constant 31 : i32
    %91 = tpu.dynamic_rotate %90 by %c31_i32 dim 0 : vector<32x4xf32>, i32 -> vector<32x4xf32>
    %92 = vector.broadcast %38 : vector<32x1xf32> to vector<32x4xf32>
    %93 = arith.mulf %91, %92 : vector<32x4xf32>
    %94 = arith.addf %87, %93 : vector<32x4xf32>
    %c0_42 = arith.constant 0 : index
    %c0_43 = arith.constant 0 : index
    %95 = vector.load %arg4[%c0_42, %c0_43] : memref<3x4xf32, #tpu.memory_space<vmem>>, vector<1x4xf32>
    %96 = vector.broadcast %95 : vector<1x4xf32> to vector<32x4xf32>
    %97 = arith.addf %94, %96 : vector<32x4xf32>
    %cst_44 = arith.constant dense<0.000000e+00> : vector<4xf32>
    %98 = vector.multi_reduction <add>, %97, %cst_44 [0] : vector<32x4xf32> to vector<4xf32>
    %99 = vector.shape_cast %98 : vector<4xf32> to vector<1x4xf32>
    %cst_45 = arith.constant 3.200000e+01 : f32
    %100 = vector.broadcast %cst_45 : f32 to vector<1x4xf32>
    %101 = arith.divf %99, %100 : vector<1x4xf32>
    %102 = vector.broadcast %101 : vector<1x4xf32> to vector<32x4xf32>
    %103 = arith.subf %97, %102 : vector<32x4xf32>
    %104 = arith.mulf %103, %103 : vector<32x4xf32>
    %cst_46 = arith.constant dense<0.000000e+00> : vector<4xf32>
    %105 = vector.multi_reduction <add>, %104, %cst_46 [0] : vector<32x4xf32> to vector<4xf32>
    %106 = vector.shape_cast %105 : vector<4xf32> to vector<1x4xf32>
    %cst_47 = arith.constant 3.200000e+01 : f32
    %107 = vector.broadcast %cst_47 : f32 to vector<1x4xf32>
    %108 = arith.divf %106, %107 : vector<1x4xf32>
    %109 = vector.broadcast %101 : vector<1x4xf32> to vector<32x4xf32>
    %110 = arith.subf %97, %109 : vector<32x4xf32>
    %cst_48 = arith.constant 9.99999974E-6 : f32
    %111 = vector.broadcast %cst_48 : f32 to vector<1x4xf32>
    %112 = arith.addf %108, %111 : vector<1x4xf32>
    %113 = math.rsqrt %112 : vector<1x4xf32>
    %114 = vector.broadcast %113 : vector<1x4xf32> to vector<32x4xf32>
    %115 = arith.mulf %110, %114 : vector<32x4xf32>
    %c0_49 = arith.constant 0 : index
    %c4_50 = arith.constant 4 : index
    %116 = vector.load %arg6[%c0_49, %c4_50] : memref<32x16xf32, #tpu.memory_space<vmem>>, vector<32x4xf32>
    tpu.vector_store %arg6[%c0_49, %c4_50], %115 {strides = array<i32>} : memref<32x16xf32, #tpu.memory_space<vmem>>, vector<32x4xf32>,
    %cst_51 = arith.constant 0.000000e+00 : f32
    %117 = vector.broadcast %cst_51 : f32 to vector<32x4xf32>
    %118 = arith.maximumf %97, %117 : vector<32x4xf32>
    %119 = vector.shape_cast %118 : vector<32x4xf32> to vector<2x16x4xf32>
    %cst_52 = arith.constant dense<0xFF800000> : vector<2x4xf32>
    %120 = vector.multi_reduction <maximumf>, %119, %cst_52 [1] : vector<2x16x4xf32> to vector<2x4xf32>
    %c0_53 = arith.constant 0 : index
    %c4_54 = arith.constant 4 : index
    %121 = vector.load %arg5[%c0_53, %c4_54] : memref<2x16xf32, #tpu.memory_space<vmem>>, vector<2x4xf32>
    tpu.vector_store %arg5[%c0_53, %c4_54], %120 {strides = array<i32>} : memref<2x16xf32, #tpu.memory_space<vmem>>, vector<2x4xf32>,
    %c1_55 = arith.constant 1 : index
    %c0_56 = arith.constant 0 : index
    %122 = vector.load %arg1[%c1_55, %c0_56] : memref<3x16xf32, #tpu.memory_space<vmem>>, vector<1x16xf32>
    %c1_57 = arith.constant 1 : index
    %c0_58 = arith.constant 0 : index
    %123 = vector.load %arg2[%c1_57, %c0_58] : memref<3x16xf32, #tpu.memory_space<vmem>>, vector<1x16xf32>
    %c0_59 = arith.constant 0 : index
    %c0_60 = arith.constant 0 : index
    %124 = vector.load %arg6[%c0_59, %c0_60] : memref<32x16xf32, #tpu.memory_space<vmem>>, vector<32x16xf32>
    %125 = vector.broadcast %122 : vector<1x16xf32> to vector<32x16xf32>
    %126 = arith.mulf %124, %125 : vector<32x16xf32>
    %127 = vector.broadcast %123 : vector<1x16xf32> to vector<32x16xf32>
    %128 = arith.addf %126, %127 : vector<32x16xf32>
    %cst_61 = arith.constant 0.000000e+00 : f32
    %129 = vector.broadcast %cst_61 : f32 to vector<32x16xf32>
    %130 = arith.maximumf %128, %129 : vector<32x16xf32>
    %131 = arith.truncf %130 : vector<32x16xf32> to vector<32x16xbf16>
    %cst_62 = arith.constant 0.000000e+00 : f32
    %132 = vector.broadcast %cst_62 : f32 to vector<32x4xf32>
    %c3 = arith.constant 3 : index
    %c0_63 = arith.constant 0 : index
    %c0_64 = arith.constant 0 : index
    %133 = vector.load %arg3[%c3, %c0_63, %c0_64] : memref<9x16x4xbf16, #tpu.memory_space<vmem>>, vector<1x16x4xbf16>
    %134 = vector.shape_cast %133 : vector<1x16x4xbf16> to vector<16x4xbf16>
    %cst_65 = arith.constant dense<0.000000e+00> : vector<32x4xf32>
    %135 = tpu.matmul %131, %134, %cst_65 {dimension_numbers = #tpu.dot_dimension_numbers<[1], [0], [0], [1], [0, 0, 1, 1], [], []>} : vector<32x16xbf16>, vector<16x4xbf16>, vector<32x4xf32> -> vector<32x4xf32>
    %c1_i32_66 = arith.constant 1 : i32
    %136 = tpu.dynamic_rotate %135 by %c1_i32_66 dim 0 : vector<32x4xf32>, i32 -> vector<32x4xf32>
    %137 = vector.broadcast %27 : vector<32x1xf32> to vector<32x4xf32>
    %138 = arith.mulf %136, %137 : vector<32x4xf32>
    %139 = arith.addf %132, %138 : vector<32x4xf32>
    %c4_67 = arith.constant 4 : index
    %c0_68 = arith.constant 0 : index
    %c0_69 = arith.constant 0 : index
    %140 = vector.load %arg3[%c4_67, %c0_68, %c0_69] : memref<9x16x4xbf16, #tpu.memory_space<vmem>>, vector<1x16x4xbf16>
    %141 = vector.shape_cast %140 : vector<1x16x4xbf16> to vector<16x4xbf16>
    %cst_70 = arith.constant dense<0.000000e+00> : vector<32x4xf32>
    %142 = tpu.matmul %131, %141, %cst_70 {dimension_numbers = #tpu.dot_dimension_numbers<[1], [0], [0], [1], [0, 0, 1, 1], [], []>} : vector<32x16xbf16>, vector<16x4xbf16>, vector<32x4xf32> -> vector<32x4xf32>
    %143 = arith.addf %139, %142 : vector<32x4xf32>
    %c5 = arith.constant 5 : index
    %c0_71 = arith.constant 0 : index
    %c0_72 = arith.constant 0 : index
    %144 = vector.load %arg3[%c5, %c0_71, %c0_72] : memref<9x16x4xbf16, #tpu.memory_space<vmem>>, vector<1x16x4xbf16>
    %145 = vector.shape_cast %144 : vector<1x16x4xbf16> to vector<16x4xbf16>
    %cst_73 = arith.constant dense<0.000000e+00> : vector<32x4xf32>
    %146 = tpu.matmul %131, %145, %cst_73 {dimension_numbers = #tpu.dot_dimension_numbers<[1], [0], [0], [1], [0, 0, 1, 1], [], []>} : vector<32x16xbf16>, vector<16x4xbf16>, vector<32x4xf32> -> vector<32x4xf32>
    %c31_i32_74 = arith.constant 31 : i32
    %147 = tpu.dynamic_rotate %146 by %c31_i32_74 dim 0 : vector<32x4xf32>, i32 -> vector<32x4xf32>
    %148 = vector.broadcast %38 : vector<32x1xf32> to vector<32x4xf32>
    %149 = arith.mulf %147, %148 : vector<32x4xf32>
    %150 = arith.addf %143, %149 : vector<32x4xf32>
    %c1_75 = arith.constant 1 : index
    %c0_76 = arith.constant 0 : index
    %151 = vector.load %arg4[%c1_75, %c0_76] : memref<3x4xf32, #tpu.memory_space<vmem>>, vector<1x4xf32>
    %152 = vector.broadcast %151 : vector<1x4xf32> to vector<32x4xf32>
    %153 = arith.addf %150, %152 : vector<32x4xf32>
    %cst_77 = arith.constant dense<0.000000e+00> : vector<4xf32>
    %154 = vector.multi_reduction <add>, %153, %cst_77 [0] : vector<32x4xf32> to vector<4xf32>
    %155 = vector.shape_cast %154 : vector<4xf32> to vector<1x4xf32>
    %cst_78 = arith.constant 3.200000e+01 : f32
    %156 = vector.broadcast %cst_78 : f32 to vector<1x4xf32>
    %157 = arith.divf %155, %156 : vector<1x4xf32>
    %158 = vector.broadcast %157 : vector<1x4xf32> to vector<32x4xf32>
    %159 = arith.subf %153, %158 : vector<32x4xf32>
    %160 = arith.mulf %159, %159 : vector<32x4xf32>
    %cst_79 = arith.constant dense<0.000000e+00> : vector<4xf32>
    %161 = vector.multi_reduction <add>, %160, %cst_79 [0] : vector<32x4xf32> to vector<4xf32>
    %162 = vector.shape_cast %161 : vector<4xf32> to vector<1x4xf32>
    %cst_80 = arith.constant 3.200000e+01 : f32
    %163 = vector.broadcast %cst_80 : f32 to vector<1x4xf32>
    %164 = arith.divf %162, %163 : vector<1x4xf32>
    %165 = vector.broadcast %157 : vector<1x4xf32> to vector<32x4xf32>
    %166 = arith.subf %153, %165 : vector<32x4xf32>
    %cst_81 = arith.constant 9.99999974E-6 : f32
    %167 = vector.broadcast %cst_81 : f32 to vector<1x4xf32>
    %168 = arith.addf %164, %167 : vector<1x4xf32>
    %169 = math.rsqrt %168 : vector<1x4xf32>
    %170 = vector.broadcast %169 : vector<1x4xf32> to vector<32x4xf32>
    %171 = arith.mulf %166, %170 : vector<32x4xf32>
    %c0_82 = arith.constant 0 : index
    %c8 = arith.constant 8 : index
    %172 = vector.load %arg6[%c0_82, %c8] : memref<32x16xf32, #tpu.memory_space<vmem>>, vector<32x4xf32>
    tpu.vector_store %arg6[%c0_82, %c8], %171 {strides = array<i32>} : memref<32x16xf32, #tpu.memory_space<vmem>>, vector<32x4xf32>,
    %cst_83 = arith.constant 0.000000e+00 : f32
    %173 = vector.broadcast %cst_83 : f32 to vector<32x4xf32>
    %174 = arith.maximumf %153, %173 : vector<32x4xf32>
    %175 = vector.shape_cast %174 : vector<32x4xf32> to vector<2x16x4xf32>
    %cst_84 = arith.constant dense<0xFF800000> : vector<2x4xf32>
    %176 = vector.multi_reduction <maximumf>, %175, %cst_84 [1] : vector<2x16x4xf32> to vector<2x4xf32>
    %c0_85 = arith.constant 0 : index
    %c8_86 = arith.constant 8 : index
    %177 = vector.load %arg5[%c0_85, %c8_86] : memref<2x16xf32, #tpu.memory_space<vmem>>, vector<2x4xf32>
    tpu.vector_store %arg5[%c0_85, %c8_86], %176 {strides = array<i32>} : memref<2x16xf32, #tpu.memory_space<vmem>>, vector<2x4xf32>,
    %c2_87 = arith.constant 2 : index
    %c0_88 = arith.constant 0 : index
    %178 = vector.load %arg1[%c2_87, %c0_88] : memref<3x16xf32, #tpu.memory_space<vmem>>, vector<1x16xf32>
    %c2_89 = arith.constant 2 : index
    %c0_90 = arith.constant 0 : index
    %179 = vector.load %arg2[%c2_89, %c0_90] : memref<3x16xf32, #tpu.memory_space<vmem>>, vector<1x16xf32>
    %c0_91 = arith.constant 0 : index
    %c0_92 = arith.constant 0 : index
    %180 = vector.load %arg6[%c0_91, %c0_92] : memref<32x16xf32, #tpu.memory_space<vmem>>, vector<32x16xf32>
    %181 = vector.broadcast %178 : vector<1x16xf32> to vector<32x16xf32>
    %182 = arith.mulf %180, %181 : vector<32x16xf32>
    %183 = vector.broadcast %179 : vector<1x16xf32> to vector<32x16xf32>
    %184 = arith.addf %182, %183 : vector<32x16xf32>
    %cst_93 = arith.constant 0.000000e+00 : f32
    %185 = vector.broadcast %cst_93 : f32 to vector<32x16xf32>
    %186 = arith.maximumf %184, %185 : vector<32x16xf32>
    %187 = arith.truncf %186 : vector<32x16xf32> to vector<32x16xbf16>
    %cst_94 = arith.constant 0.000000e+00 : f32
    %188 = vector.broadcast %cst_94 : f32 to vector<32x4xf32>
    %c6 = arith.constant 6 : index
    %c0_95 = arith.constant 0 : index
    %c0_96 = arith.constant 0 : index
    %189 = vector.load %arg3[%c6, %c0_95, %c0_96] : memref<9x16x4xbf16, #tpu.memory_space<vmem>>, vector<1x16x4xbf16>
    %190 = vector.shape_cast %189 : vector<1x16x4xbf16> to vector<16x4xbf16>
    %cst_97 = arith.constant dense<0.000000e+00> : vector<32x4xf32>
    %191 = tpu.matmul %187, %190, %cst_97 {dimension_numbers = #tpu.dot_dimension_numbers<[1], [0], [0], [1], [0, 0, 1, 1], [], []>} : vector<32x16xbf16>, vector<16x4xbf16>, vector<32x4xf32> -> vector<32x4xf32>
    %c1_i32_98 = arith.constant 1 : i32
    %192 = tpu.dynamic_rotate %191 by %c1_i32_98 dim 0 : vector<32x4xf32>, i32 -> vector<32x4xf32>
    %193 = vector.broadcast %27 : vector<32x1xf32> to vector<32x4xf32>
    %194 = arith.mulf %192, %193 : vector<32x4xf32>
    %195 = arith.addf %188, %194 : vector<32x4xf32>
    %c7 = arith.constant 7 : index
    %c0_99 = arith.constant 0 : index
    %c0_100 = arith.constant 0 : index
    %196 = vector.load %arg3[%c7, %c0_99, %c0_100] : memref<9x16x4xbf16, #tpu.memory_space<vmem>>, vector<1x16x4xbf16>
    %197 = vector.shape_cast %196 : vector<1x16x4xbf16> to vector<16x4xbf16>
    %cst_101 = arith.constant dense<0.000000e+00> : vector<32x4xf32>
    %198 = tpu.matmul %187, %197, %cst_101 {dimension_numbers = #tpu.dot_dimension_numbers<[1], [0], [0], [1], [0, 0, 1, 1], [], []>} : vector<32x16xbf16>, vector<16x4xbf16>, vector<32x4xf32> -> vector<32x4xf32>
    %199 = arith.addf %195, %198 : vector<32x4xf32>
    %c8_102 = arith.constant 8 : index
    %c0_103 = arith.constant 0 : index
    %c0_104 = arith.constant 0 : index
    %200 = vector.load %arg3[%c8_102, %c0_103, %c0_104] : memref<9x16x4xbf16, #tpu.memory_space<vmem>>, vector<1x16x4xbf16>
    %201 = vector.shape_cast %200 : vector<1x16x4xbf16> to vector<16x4xbf16>
    %cst_105 = arith.constant dense<0.000000e+00> : vector<32x4xf32>
    %202 = tpu.matmul %187, %201, %cst_105 {dimension_numbers = #tpu.dot_dimension_numbers<[1], [0], [0], [1], [0, 0, 1, 1], [], []>} : vector<32x16xbf16>, vector<16x4xbf16>, vector<32x4xf32> -> vector<32x4xf32>
    %c31_i32_106 = arith.constant 31 : i32
    %203 = tpu.dynamic_rotate %202 by %c31_i32_106 dim 0 : vector<32x4xf32>, i32 -> vector<32x4xf32>
    %204 = vector.broadcast %38 : vector<32x1xf32> to vector<32x4xf32>
    %205 = arith.mulf %203, %204 : vector<32x4xf32>
    %206 = arith.addf %199, %205 : vector<32x4xf32>
    %c2_107 = arith.constant 2 : index
    %c0_108 = arith.constant 0 : index
    %207 = vector.load %arg4[%c2_107, %c0_108] : memref<3x4xf32, #tpu.memory_space<vmem>>, vector<1x4xf32>
    %208 = vector.broadcast %207 : vector<1x4xf32> to vector<32x4xf32>
    %209 = arith.addf %206, %208 : vector<32x4xf32>
    %cst_109 = arith.constant dense<0.000000e+00> : vector<4xf32>
    %210 = vector.multi_reduction <add>, %209, %cst_109 [0] : vector<32x4xf32> to vector<4xf32>
    %211 = vector.shape_cast %210 : vector<4xf32> to vector<1x4xf32>
    %cst_110 = arith.constant 3.200000e+01 : f32
    %212 = vector.broadcast %cst_110 : f32 to vector<1x4xf32>
    %213 = arith.divf %211, %212 : vector<1x4xf32>
    %214 = vector.broadcast %213 : vector<1x4xf32> to vector<32x4xf32>
    %215 = arith.subf %209, %214 : vector<32x4xf32>
    %216 = arith.mulf %215, %215 : vector<32x4xf32>
    %cst_111 = arith.constant dense<0.000000e+00> : vector<4xf32>
    %217 = vector.multi_reduction <add>, %216, %cst_111 [0] : vector<32x4xf32> to vector<4xf32>
    %218 = vector.shape_cast %217 : vector<4xf32> to vector<1x4xf32>
    %cst_112 = arith.constant 3.200000e+01 : f32
    %219 = vector.broadcast %cst_112 : f32 to vector<1x4xf32>
    %220 = arith.divf %218, %219 : vector<1x4xf32>
    %221 = vector.broadcast %213 : vector<1x4xf32> to vector<32x4xf32>
    %222 = arith.subf %209, %221 : vector<32x4xf32>
    %cst_113 = arith.constant 9.99999974E-6 : f32
    %223 = vector.broadcast %cst_113 : f32 to vector<1x4xf32>
    %224 = arith.addf %220, %223 : vector<1x4xf32>
    %225 = math.rsqrt %224 : vector<1x4xf32>
    %226 = vector.broadcast %225 : vector<1x4xf32> to vector<32x4xf32>
    %227 = arith.mulf %222, %226 : vector<32x4xf32>
    %c0_114 = arith.constant 0 : index
    %c12 = arith.constant 12 : index
    %228 = vector.load %arg6[%c0_114, %c12] : memref<32x16xf32, #tpu.memory_space<vmem>>, vector<32x4xf32>
    tpu.vector_store %arg6[%c0_114, %c12], %227 {strides = array<i32>} : memref<32x16xf32, #tpu.memory_space<vmem>>, vector<32x4xf32>,
    %cst_115 = arith.constant 0.000000e+00 : f32
    %229 = vector.broadcast %cst_115 : f32 to vector<32x4xf32>
    %230 = arith.maximumf %209, %229 : vector<32x4xf32>
    %231 = vector.shape_cast %230 : vector<32x4xf32> to vector<2x16x4xf32>
    %cst_116 = arith.constant dense<0xFF800000> : vector<2x4xf32>
    %232 = vector.multi_reduction <maximumf>, %231, %cst_116 [1] : vector<2x16x4xf32> to vector<2x4xf32>
    %c0_117 = arith.constant 0 : index
    %c12_118 = arith.constant 12 : index
    %233 = vector.load %arg5[%c0_117, %c12_118] : memref<2x16xf32, #tpu.memory_space<vmem>>, vector<2x4xf32>
    tpu.vector_store %arg5[%c0_117, %c12_118], %232 {strides = array<i32>} : memref<2x16xf32, #tpu.memory_space<vmem>>, vector<2x4xf32>,
    return
  }
}

</mosaic_0001>

<llo_original>
// kernel: tpu_custom_call.1
$region0: #{tpu_custom_call.1}
  #allocation0 [shape = 'u32[]', space=smem, size = 0x4, offset = 0x4, fixed_abs, tag = 'smem constant byte address 0x4 - core index']
  #allocation1 [shape = 'u32[144,128]{1,0:T(1,128)}', space=vmem, size = 0x12000, scoped, tag = 'internal scratch']
  #allocation2 [shape = 'f32[32,16]{1,0:T(8,128)}', space=vmem, size = 0x4000, scoped, tag = 'scratch operand']
  %s0 = inlined_call_operand.vmem [shape: f32[32,4], index: 0, kind: input, shape index: {}]
  %s1 = inlined_call_operand.vmem [shape: f32[3,16], index: 1, kind: input, shape index: {}]
  %s2 = inlined_call_operand.vmem [shape: f32[3,16], index: 2, kind: input, shape index: {}]
  %s3 = inlined_call_operand.vmem [shape: bf16[9,16,4], index: 3, kind: input, shape index: {}]
  %s4 = inlined_call_operand.vmem [shape: f32[3,4], index: 4, kind: input, shape index: {}]
  %s5 = inlined_call_operand.hbm [shape: f32[2,16], index: 5, kind: output, shape index: {}]
  %s6 = sld [smem:[#allocation0]]
  $region30: #{tpu_custom_call.1} parent=0
    _
  %s8 = ssub.s32 1, %s6
  %s9 = scalar_select 0, %s8, %s6
  $region1: #{tpu_custom_call.1} parent=0
    #allocation3 [shape = 'u8[1024]{0}', space=vmem, size = 0x400, scoped, tag = 'output window, operand 0, single buffered']
    #allocation4 [shape = 's32[1]{0}', space=sflag, size = 0x4, scoped, tag = 'scoped memory for tpu_custom_call.1']
    %10 = vsyncpa [#allocation4], 0
    // Predicated region
    $region2: #{tpu_custom_call.1} parent=1 // pred_check
      _
    $region3: #{tpu_custom_call.1} parent=1 // pred_check_branch
      %12 = sbr.rel (0) target = $region5
    $region4: #{tpu_custom_call.1} parent=1 // pred_region
      _
    $region5: #{tpu_custom_call.1} parent=1 // pred_fallthru
      _
    // Predicated region
    $region6: #{tpu_custom_call.1} parent=1 // pred_check
      _
    $region7: #{tpu_custom_call.1} parent=1 // pred_check_branch
      %14 = sbr.rel (0) target = $region9
    $region8: #{tpu_custom_call.1} parent=1 // pred_region
      _
    $region9: #{tpu_custom_call.1} parent=1 // pred_fallthru
      _
    // Predicated region
    $region10: #{tpu_custom_call.1} parent=1 // pred_check
      _
    $region11: #{tpu_custom_call.1} parent=1 // pred_check_branch
      %16 = sbr.rel (0) target = $region13
    $region12: #{tpu_custom_call.1} parent=1 // pred_region
      _
    $region13: #{tpu_custom_call.1} parent=1 // pred_fallthru
      _
    // Predicated region
    $region14: #{tpu_custom_call.1} parent=1 // pred_check
      _
    $region15: #{tpu_custom_call.1} parent=1 // pred_check_branch
      %18 = sbr.rel (0) target = $region17
    $region16: #{tpu_custom_call.1} parent=1 // pred_region
      _
    $region17: #{tpu_custom_call.1} parent=1 // pred_fallthru
      _
    // Predicated region
    $region18: #{tpu_custom_call.1} parent=1 // pred_check
      _
    $region19: #{tpu_custom_call.1} parent=1 // pred_check_branch
      %20 = sbr.rel (0) target = $region21
    $region20: #{tpu_custom_call.1} parent=1 // pred_region
      _
    $region21: #{tpu_custom_call.1} parent=1 // pred_fallthru
      _
    %v22 = vlaneseq
    %v23 = vshrl.u32 %v22, 7
    %v24 = vadd.s32 %v23, 8
    %v25 = vadd.s32 %v23, 16
    %v26 = vadd.s32 %v23, 24
    %vm27 = vcmp.lt.s32.totalorder %v23, 0
    %v28 = vsub.s32 0, %v23
    %v29 = vsel %vm27, %v28, %v23
    %v30 = vshrl.u32 %v29, 4
    %v31 = vand.u32 %v29, 15
    %v32 = vsub.s32 0, %v31
    %v33 = vsel %vm27, %v32, %v31
    %vm34 = vcmp.lt.s32.totalorder %v24, 0
    %v35 = vsub.s32 0, %v24
    %v36 = vsel %vm34, %v35, %v24
    %v37 = vshrl.u32 %v36, 4
    %v38 = vand.u32 %v36, 15
    %v39 = vsub.s32 0, %v38
    %v40 = vsel %vm34, %v39, %v38
    %vm41 = vcmp.lt.s32.totalorder %v25, 0
    %v42 = vsub.s32 0, %v25
    %v43 = vsel %vm41, %v42, %v25
    %v44 = vshrl.u32 %v43, 4
    %v45 = vand.u32 %v43, 15
    %v46 = vsub.s32 0, %v45
    %v47 = vsel %vm41, %v46, %v45
    %vm48 = vcmp.lt.s32.totalorder %v26, 0
    %v49 = vsub.s32 0, %v26
    %v50 = vsel %vm48, %v49, %v26
    %v51 = vshrl.u32 %v50, 4
    %v52 = vand.u32 %v50, 15
    %v53 = vsub.s32 0, %v52
    %v54 = vsel %vm48, %v53, %v52
    %vm55 = vcmp.ne.s32.totalorder %v33, 0
    %vm56 = vcmp.ne.s32.totalorder %v40, 0
    %vm57 = vcmp.ne.s32.totalorder %v47, 0
    %vm58 = vcmp.ne.s32.totalorder %v54, 0
    %vm59 = vcmp.lt.s32.totalorder %v33, 0
    %vm60 = vcmp.lt.s32.totalorder %v40, 0
    %vm61 = vcmp.lt.s32.totalorder %v47, 0
    %vm62 = vcmp.lt.s32.totalorder %v54, 0
    %vm63 = vmand %vm59, %vm55
    %vm64 = vmand %vm60, %vm56
    %vm65 = vmand %vm61, %vm57
    %vm66 = vmand %vm62, %vm58
    %v67 = vadd.s32 %v33, 16
    %v68 = vadd.s32 %v40, 16
    %v69 = vadd.s32 %v47, 16
    %v70 = vadd.s32 %v54, 16
    %v71 = vsel %vm63, %v67, %v33
    %v72 = vsel %vm64, %v68, %v40
    %v73 = vsel %vm65, %v69, %v47
    %v74 = vsel %vm66, %v70, %v54
    %v75 = vadd.s32 %v71, 4294967295
    %v76 = vadd.s32 %v72, 4294967295
    %v77 = vadd.s32 %v73, 4294967295
    %v78 = vadd.s32 %v74, 4294967295
    %vm79 = vcmp.ge.s32.totalorder %v75, 0
    %vm80 = vcmp.ge.s32.totalorder %v76, 0
    %vm81 = vcmp.ge.s32.totalorder %v77, 0
    %vm82 = vcmp.ge.s32.totalorder %v78, 0
    %vm83 = vcmp.lt.s32.totalorder %v75, 16
    %vm84 = vcmp.lt.s32.totalorder %v76, 16
    %vm85 = vcmp.lt.s32.totalorder %v77, 16
    %vm86 = vcmp.lt.s32.totalorder %v78, 16
    %vm87 = vmand %vm79, %vm83
    %vm88 = vmand %vm80, %vm84
    %vm89 = vmand %vm81, %vm85
    %vm90 = vmand %vm82, %vm86
    %v91 = vsel %vm87, 1, 0
    %v92 = vsel %vm88, 1, 0
    %v93 = vsel %vm89, 1, 0
    %v94 = vsel %vm90, 1, 0
    %v95 = vcvt.s32.f32 %v91
    %v96 = vcvt.s32.f32 %v92
    %v97 = vcvt.s32.f32 %v93
    %v98 = vcvt.s32.f32 %v94
    %v99 = vadd.s32 %v71, 1
    %v100 = vadd.s32 %v72, 1
    %v101 = vadd.s32 %v73, 1
    %v102 = vadd.s32 %v74, 1
    %vm103 = vcmp.ge.s32.totalorder %v99, 0
    %vm104 = vcmp.ge.s32.totalorder %v100, 0
    %vm105 = vcmp.ge.s32.totalorder %v101, 0
    %vm106 = vcmp.ge.s32.totalorder %v102, 0
    %vm107 = vcmp.lt.s32.totalorder %v99, 16
    %vm108 = vcmp.lt.s32.totalorder %v100, 16
    %vm109 = vcmp.lt.s32.totalorder %v101, 16
    %vm110 = vcmp.lt.s32.totalorder %v102, 16
    %vm111 = vmand %vm103, %vm107
    %vm112 = vmand %vm104, %vm108
    %vm113 = vmand %vm105, %vm109
    %vm114 = vmand %vm106, %vm110
    %v115 = vsel %vm111, 1, 0
    %v116 = vsel %vm112, 1, 0
    %v117 = vsel %vm113, 1, 0
    %v118 = vsel %vm114, 1, 0
    %v119 = vcvt.s32.f32 %v115
    %v120 = vcvt.s32.f32 %v116
    %v121 = vcvt.s32.f32 %v117
    %v122 = vcvt.s32.f32 %v118
    %v123 = vld [vmem:[%s0] sm:$0xff]
    %v124 = vld [vmem:[%s0 + $0x8] sm:$0xff]
    %v125 = vld [vmem:[%s0 + $0x10] sm:$0xff]
    %v126 = vld [vmem:[%s0 + $0x18] sm:$0xff]
    %vm127 = vcmask 31744
    %v128 = vsel %vm127, %v123, 0.0
    %v129 = vsel %vm127, %v124, 0.0
    %v130 = vadd.f32 %v128, %v129
    %v131 = vsel %vm127, %v125, 0.0
    %v132 = vadd.f32 %v130, %v131
    %v133 = vsel %vm127, %v126, 0.0
    %v134 = vadd.f32 %v132, %v133
    %v135 = vrot.slane %v134, 4
    %v136 = vadd.f32 %v134, %v135
    %v137 = vrot.slane %v136, 2
    %v138 = vadd.f32 %v136, %v137
    %v139 = vrot.slane %v138, 1
    %v140 = vadd.f32 %v138, %v139
    %v141 = vrcp.pop 32.0
    %v142 = vmul.f32 %v140, %v141
    %v143 = vsub.f32 %v123, %v142
    %v144 = vsub.f32 %v124, %v142
    %v145 = vsub.f32 %v125, %v142
    %v146 = vsub.f32 %v126, %v142
    %v147 = vmul.f32 %v143, %v143
    %v148 = vmul.f32 %v144, %v144
    %v149 = vmul.f32 %v145, %v145
    %v150 = vmul.f32 %v146, %v146
    %v151 = vsel %vm127, %v147, 0.0
    %v152 = vsel %vm127, %v148, 0.0
    %v153 = vadd.f32 %v151, %v152
    %v154 = vsel %vm127, %v149, 0.0
    %v155 = vadd.f32 %v153, %v154
    %v156 = vsel %vm127, %v150, 0.0
    %v157 = vadd.f32 %v155, %v156
    %v158 = vrot.slane %v157, 4
    %v159 = vadd.f32 %v157, %v158
    %v160 = vrot.slane %v159, 2
    %v161 = vadd.f32 %v159, %v160
    %v162 = vrot.slane %v161, 1
    %v163 = vadd.f32 %v161, %v162
    %v164 = vmul.f32 %v163, %v141
    %v165 = vadd.f32 %v164, 1e-05
    %v166 = vrsqrt.pop %v165
    %v167 = vmul.f32 %v143, %v166
    %v168 = vmul.f32 %v144, %v166
    %v169 = vmul.f32 %v145, %v166
    %v170 = vmul.f32 %v146, %v166
    %171 = vst.msk [vmem:[#allocation2] sm:$0xff] %vm127, %v167
    %172 = vst.msk [vmem:[#allocation2 + $0x8] sm:$0xff] %vm127, %v168
    %173 = vst.msk [vmem:[#allocation2 + $0x10] sm:$0xff] %vm127, %v169
    %174 = vst.msk [vmem:[#allocation2 + $0x18] sm:$0xff] %vm127, %v170
    %vm175 = vcmask 130080
    %176 = vst.msk [vmem:[#allocation2] sm:$0xff] %vm175, 0.0
    %177 = vst.msk [vmem:[#allocation2 + $0x8] sm:$0xff] %vm175, 0.0
    %178 = vst.msk [vmem:[#allocation2 + $0x10] sm:$0xff] %vm175, 0.0
    %179 = vst.msk [vmem:[#allocation2 + $0x18] sm:$0xff] %vm175, 0.0
    %v180 = vmax.f32 %v123, 0.0
    %v181 = vmax.f32 %v124, 0.0
    %v182 = vmax.f32 %v125, 0.0
    %v183 = vmax.f32 %v126, 0.0
    %v184 = vsel %vm127, %v180, -inf
    %v185 = vsel %vm127, %v181, -inf
    %v186 = vmax.f32 %v184, %v185
    %v187 = vrot.slane %v186, 4
    %v188 = vmax.f32 %v186, %v187
    %v189 = vrot.slane %v188, 2
    %v190 = vmax.f32 %v188, %v189
    %v191 = vrot.slane %v190, 1
    %v192 = vmax.f32 %v190, %v191
    %v193 = vsel %vm127, %v182, -inf
    %v194 = vsel %vm127, %v183, -inf
    %v195 = vmax.f32 %v193, %v194
    %v196 = vrot.slane %v195, 4
    %v197 = vmax.f32 %v195, %v196
    %v198 = vrot.slane %v197, 2
    %v199 = vmax.f32 %v197, %v198
    %v200 = vrot.slane %v199, 1
    %v201 = vmax.f32 %v199, %v200
    %vm204 = vcmask 1041409
    %v205 = vsel %vm204, %v201, %v192
    %vm207 = vcmask 25600
    %208 = vst.msk [vmem:[#allocation3] sm:$0x3] %vm207, %v205
    %v209 = vld [vmem:[%s1] sm:$0x1]
    %v210 = vld [vmem:[%s2] sm:$0x1]
    %v211 = vld [vmem:[#allocation2] sm:$0xff]
    %v212 = vld [vmem:[#allocation2 + $0x8] sm:$0xff]
    %v213 = vld [vmem:[#allocation2 + $0x10] sm:$0xff]
    %v214 = vld [vmem:[#allocation2 + $0x18] sm:$0xff]
    %v215 = vlaneseq
    %v216 = vshrl.u32 %v215, 7
    %v217 = vsub.s32 0, %v216
    %v218 = vrot.slane %v209, %v217
    %v219 = vmul.f32 %v211, %v218
    %v220 = vmul.f32 %v212, %v218
    %v221 = vmul.f32 %v213, %v218
    %v222 = vmul.f32 %v214, %v218
    %v223 = vlaneseq
    %v224 = vshrl.u32 %v223, 7
    %v225 = vsub.s32 0, %v224
    %v226 = vrot.slane %v210, %v225
    %v227 = vadd.f32 %v219, %v226
    %v228 = vadd.f32 %v220, %v226
    %v229 = vadd.f32 %v221, %v226
    %v230 = vadd.f32 %v222, %v226
    %v231 = vmax.f32 %v227, 0.0
    %v232 = vmax.f32 %v228, 0.0
    %v233 = vmax.f32 %v229, 0.0
    %v234 = vmax.f32 %v230, 0.0
    %v235 = vpack.c.bf16 %v232, %v231
    %v236 = vpack.c.bf16 %v234, %v233
    %v237 = vld [vmem:[%s3] sm:$0xf]
    %v238 = vld [vmem:[%s3 + $0x4] sm:$0xf]
    %v241 = vunpack.c.l.b16 %v237
    %v242 = vunpack.c.l.b16 %v238
    %v243 = vpack.c.b16 %v242, %v241
    %vm245 = vcmask 130048
    %v247 = vsel %vm245, %v235, 0
    %v250 = vsel %vm245, %v236, 0
    %252 = vmatprep.subr.bf16.mxu0 0
    %253 = vmatpush1.bf16.msra.mxu0 0
    %254 = vmatprep.subr.bf16.mxu0 0
    %255 = vmatpush1.bf16.msra.mxu0 0
    %256 = vmatprep.subr.bf16.mxu0 0
    %257 = vmatpush1.bf16.msra.mxu0 0
    %258 = vmatprep.subr.bf16.mxu0 0
    %259 = vmatpush1.bf16.msra.mxu0 0
    %260 = vmatprep.subr.bf16.mxu0 0
    %261 = vmatpush1.bf16.msra.mxu0 0
    %262 = vmatprep.subr.bf16.mxu0 0
    %263 = vmatpush1.bf16.msra.mxu0 0
    %264 = vmatprep.subr.bf16.mxu0 0
    %265 = vmatpush1.bf16.msra.mxu0 0
    %266 = vmatprep.subr.bf16.mxu0 0
    %267 = vmatpush1.bf16.msra.mxu0 %v243
    %268 = vmatprep.subr.bf16.mxu0 0
    %269 = vmatpush2.bf16.msra.mxu0 0
    %270 = vmatprep.subr.bf16.mxu0 0
    %271 = vmatpush2.bf16.msra.mxu0 0
    %272 = vmatprep.subr.bf16.mxu0 0
    %273 = vmatpush2.bf16.msra.mxu0 0
    %274 = vmatprep.subr.bf16.mxu0 0
    %275 = vmatpush2.bf16.msra.mxu0 0
    %276 = vmatprep.subr.bf16.mxu0 0
    %277 = vmatpush2.bf16.msra.mxu0 0
    %278 = vmatprep.subr.bf16.mxu0 0
    %279 = vmatpush2.bf16.msra.mxu0 0
    %280 = vmatprep.subr.bf16.mxu0 0
    %281 = vmatpush2.bf16.msra.mxu0 0
    %282 = vmatprep.subr.bf16.mxu0 0
    %283 = vmatpush2.bf16.msra.mxu0 0
    %284 = vmatprep.mubr.bf16.mxu0 0
    %285 = vmatmul.mubr.bf16.gmra.mxu0 %v247
    %v286 = vpop.f32.mrf.mxu0
    %v287 = vadd.f32 0.0, %v286
    %v288 = vpop.f32.mrf.mxu0
    %v289 = vpop.f32.mrf.mxu0
    %v290 = vadd.f32 0.0, %v289
    %v291 = vpop.f32.mrf.mxu0
    %292 = vmatprep.mubr.bf16.mxu0 0
    %293 = vmatmul.mubr.bf16.gmra.mxu0 %v250
    %v294 = vpop.f32.mrf.mxu0
    %v295 = vadd.f32 0.0, %v294
    %v296 = vpop.f32.mrf.mxu0
    %v297 = vpop.f32.mrf.mxu0
    %v298 = vadd.f32 0.0, %v297
    %v299 = vpop.f32.mrf.mxu0
    %300 = vdwg.mxu0
    %v301 = vrot.slane %v287, 7
    %v302 = vrot.slane %v290, 7
    %v303 = vrot.slane %v295, 7
    %v304 = vrot.slane %v298, 7
    %vm305 = vcmp.lt.s32.totalorder %v23, 1
    %v306 = vsel %vm305, %v303, %v304
    %v307 = vsel %vm305, %v302, %v303
    %v308 = vsel %vm305, %v301, %v302
    %v309 = vsel %vm305, %v304, %v301
    %v310 = vmul.f32 %v309, %v95
    %v311 = vmul.f32 %v308, %v96
    %v312 = vmul.f32 %v307, %v97
    %v313 = vmul.f32 %v306, %v98
    %v314 = vadd.f32 %v310, 0.0
    %v315 = vadd.f32 %v311, 0.0
    %v316 = vadd.f32 %v312, 0.0
    %v317 = vadd.f32 %v313, 0.0
    %s318 = scalar_lea.vmem %s3, 8
    %v319 = vld [vmem:[%s318] sm:$0xf]
    %v320 = vld [vmem:[%s318 + $0x4] sm:$0xf]
    %v323 = vunpack.c.l.b16 %v319
    %v324 = vunpack.c.l.b16 %v320
    %v325 = vpack.c.b16 %v324, %v323
    %327 = vmatprep.subr.bf16.mxu0 0
    %328 = vmatpush1.bf16.msra.mxu0 0
    %329 = vmatprep.subr.bf16.mxu0 0
    %330 = vmatpush1.bf16.msra.mxu0 0
    %331 = vmatprep.subr.bf16.mxu0 0
    %332 = vmatpush1.bf16.msra.mxu0 0
    %333 = vmatprep.subr.bf16.mxu0 0
    %334 = vmatpush1.bf16.msra.mxu0 0
    %335 = vmatprep.subr.bf16.mxu0 0
    %336 = vmatpush1.bf16.msra.mxu0 0
    %337 = vmatprep.subr.bf16.mxu0 0
    %338 = vmatpush1.bf16.msra.mxu0 0
    %339 = vmatprep.subr.bf16.mxu0 0
    %340 = vmatpush1.bf16.msra.mxu0 0
    %341 = vmatprep.subr.bf16.mxu0 0
    %342 = vmatpush1.bf16.msra.mxu0 %v325
    %343 = vmatprep.subr.bf16.mxu0 0
    %344 = vmatpush2.bf16.msra.mxu0 0
    %345 = vmatprep.subr.bf16.mxu0 0
    %346 = vmatpush2.bf16.msra.mxu0 0
    %347 = vmatprep.subr.bf16.mxu0 0
    %348 = vmatpush2.bf16.msra.mxu0 0
    %349 = vmatprep.subr.bf16.mxu0 0
    %350 = vmatpush2.bf16.msra.mxu0 0
    %351 = vmatprep.subr.bf16.mxu0 0
    %352 = vmatpush2.bf16.msra.mxu0 0
    %353 = vmatprep.subr.bf16.mxu0 0
    %354 = vmatpush2.bf16.msra.mxu0 0
    %355 = vmatprep.subr.bf16.mxu0 0
    %356 = vmatpush2.bf16.msra.mxu0 0
    %357 = vmatprep.subr.bf16.mxu0 0
    %358 = vmatpush2.bf16.msra.mxu0 0
    %359 = vmatprep.mubr.bf16.mxu0 0
    %360 = vmatmul.mubr.bf16.gmra.mxu0 %v247
    %v361 = vpop.f32.mrf.mxu0
    %v362 = vadd.f32 0.0, %v361
    %v363 = vpop.f32.mrf.mxu0
    %v364 = vpop.f32.mrf.mxu0
    %v365 = vadd.f32 0.0, %v364
    %v366 = vpop.f32.mrf.mxu0
    %367 = vmatprep.mubr.bf16.mxu0 0
    %368 = vmatmul.mubr.bf16.gmra.mxu0 %v250
    %v369 = vpop.f32.mrf.mxu0
    %v370 = vadd.f32 0.0, %v369
    %v371 = vpop.f32.mrf.mxu0
    %v372 = vpop.f32.mrf.mxu0
    %v373 = vadd.f32 0.0, %v372
    %v374 = vpop.f32.mrf.mxu0
    %375 = vdwg.mxu0
    %v376 = vadd.f32 %v314, %v362
    %v377 = vadd.f32 %v315, %v365
    %v378 = vadd.f32 %v316, %v370
    %v379 = vadd.f32 %v317, %v373
    %s380 = scalar_lea.vmem %s3, 16
    %v381 = vld [vmem:[%s380] sm:$0xf]
    %v382 = vld [vmem:[%s380 + $0x4] sm:$0xf]
    %v385 = vunpack.c.l.b16 %v381
    %v386 = vunpack.c.l.b16 %v382
    %v387 = vpack.c.b16 %v386, %v385
    %389 = vmatprep.subr.bf16.mxu0 0
    %390 = vmatpush1.bf16.msra.mxu0 0
    %391 = vmatprep.subr.bf16.mxu0 0
    %392 = vmatpush1.bf16.msra.mxu0 0
    %393 = vmatprep.subr.bf16.mxu0 0
    %394 = vmatpush1.bf16.msra.mxu0 0
    %395 = vmatprep.subr.bf16.mxu0 0
    %396 = vmatpush1.bf16.msra.mxu0 0
    %397 = vmatprep.subr.bf16.mxu0 0
    %398 = vmatpush1.bf16.msra.mxu0 0
    %399 = vmatprep.subr.bf16.mxu0 0
    %400 = vmatpush1.bf16.msra.mxu0 0
    %401 = vmatprep.subr.bf16.mxu0 0
    %402 = vmatpush1.bf16.msra.mxu0 0
    %403 = vmatprep.subr.bf16.mxu0 0
    %404 = vmatpush1.bf16.msra.mxu0 %v387
    %405 = vmatprep.subr.bf16.mxu0 0
    %406 = vmatpush2.bf16.msra.mxu0 0
    %407 = vmatprep.subr.bf16.mxu0 0
    %408 = vmatpush2.bf16.msra.mxu0 0
    %409 = vmatprep.subr.bf16.mxu0 0
    %410 = vmatpush2.bf16.msra.mxu0 0
    %411 = vmatprep.subr.bf16.mxu0 0
    %412 = vmatpush2.bf16.msra.mxu0 0
    %413 = vmatprep.subr.bf16.mxu0 0
    %414 = vmatpush2.bf16.msra.mxu0 0
    %415 = vmatprep.subr.bf16.mxu0 0
    %416 = vmatpush2.bf16.msra.mxu0 0
    %417 = vmatprep.subr.bf16.mxu0 0
    %418 = vmatpush2.bf16.msra.mxu0 0
    %419 = vmatprep.subr.bf16.mxu0 0
    %420 = vmatpush2.bf16.msra.mxu0 0
    %421 = vmatprep.mubr.bf16.mxu0 0
    %422 = vmatmul.mubr.bf16.gmra.mxu0 %v247
    %v423 = vpop.f32.mrf.mxu0
    %v424 = vadd.f32 0.0, %v423
    %v425 = vpop.f32.mrf.mxu0
    %v426 = vpop.f32.mrf.mxu0
    %v427 = vadd.f32 0.0, %v426
    %v428 = vpop.f32.mrf.mxu0
    %429 = vmatprep.mubr.bf16.mxu0 0
    %430 = vmatmul.mubr.bf16.gmra.mxu0 %v250
    %v431 = vpop.f32.mrf.mxu0
    %v432 = vadd.f32 0.0, %v431
    %v433 = vpop.f32.mrf.mxu0
    %v434 = vpop.f32.mrf.mxu0
    %v435 = vadd.f32 0.0, %v434
    %v436 = vpop.f32.mrf.mxu0
    %437 = vdwg.mxu0
    %v438 = vrot.slane %v424, 1
    %v439 = vrot.slane %v427, 1
    %v440 = vrot.slane %v432, 1
    %v441 = vrot.slane %v435, 1
    %vm442 = vcmp.lt.s32.totalorder %v23, 7
    %v443 = vsel %vm442, %v440, %v441
    %v444 = vsel %vm442, %v439, %v440
    %v445 = vsel %vm442, %v438, %v439
    %v446 = vsel %vm442, %v441, %v438
    %v447 = vmul.f32 %v445, %v119
    %v448 = vmul.f32 %v444, %v120
    %v449 = vmul.f32 %v443, %v121
    %v450 = vmul.f32 %v446, %v122
    %v451 = vadd.f32 %v376, %v447
    %v452 = vadd.f32 %v377, %v448
    %v453 = vadd.f32 %v378, %v449
    %v454 = vadd.f32 %v379, %v450
    %v455 = vld [vmem:[%s4] sm:$0x1]
    %v456 = vlaneseq
    %v457 = vshrl.u32 %v456, 7
    %v458 = vsub.s32 0, %v457
    %v459 = vrot.slane %v455, %v458
    %v460 = vadd.f32 %v451, %v459
    %v461 = vadd.f32 %v452, %v459
    %v462 = vadd.f32 %v453, %v459
    %v463 = vadd.f32 %v454, %v459
    %v464 = vsel %vm127, %v460, 0.0
    %v465 = vsel %vm127, %v461, 0.0
    %v466 = vadd.f32 %v464, %v465
    %v467 = vsel %vm127, %v462, 0.0
    %v468 = vadd.f32 %v466, %v467
    %v469 = vsel %vm127, %v463, 0.0
    %v470 = vadd.f32 %v468, %v469
    %v471 = vrot.slane %v470, 4
    %v472 = vadd.f32 %v470, %v471
    %v473 = vrot.slane %v472, 2
    %v474 = vadd.f32 %v472, %v473
    %v475 = vrot.slane %v474, 1
    %v476 = vadd.f32 %v474, %v475
    %v477 = vmul.f32 %v476, %v141
    %v478 = vsub.f32 %v460, %v477
    %v479 = vsub.f32 %v461, %v477
    %v480 = vsub.f32 %v462, %v477
    %v481 = vsub.f32 %v463, %v477
    %v482 = vmul.f32 %v478, %v478
    %v483 = vmul.f32 %v479, %v479
    %v484 = vmul.f32 %v480, %v480
    %v485 = vmul.f32 %v481, %v481
    %v486 = vsel %vm127, %v482, 0.0
    %v487 = vsel %vm127, %v483, 0.0
    %v488 = vadd.f32 %v486, %v487
    %v489 = vsel %vm127, %v484, 0.0
    %v490 = vadd.f32 %v488, %v489
    %v491 = vsel %vm127, %v485, 0.0
    %v492 = vadd.f32 %v490, %v491
    %v493 = vrot.slane %v492, 4
    %v494 = vadd.f32 %v492, %v493
    %v495 = vrot.slane %v494, 2
    %v496 = vadd.f32 %v494, %v495
    %v497 = vrot.slane %v496, 1
    %v498 = vadd.f32 %v496, %v497
    %v499 = vmul.f32 %v498, %v141
    %v500 = vadd.f32 %v499, 1e-05
    %v501 = vrsqrt.pop %v500
    %v502 = vmul.f32 %v478, %v501
    %v503 = vmul.f32 %v479, %v501
    %v504 = vmul.f32 %v480, %v501
    %v505 = vmul.f32 %v481, %v501
    %510 = vrot.lane.b32.xlu0 %v502, 4
    %v511 = vpop.permute.xlu0 %510
    %512 = vrot.lane.b32.xlu0 %v503, 4
    %v513 = vpop.permute.xlu0 %512
    %514 = vrot.lane.b32.xlu0 %v504, 4
    %v515 = vpop.permute.xlu0 %514
    %516 = vrot.lane.b32.xlu0 %v505, 4
    %v517 = vpop.permute.xlu0 %516
    %vm522 = vcmask 64544
    %523 = vst.msk [vmem:[#allocation2] sm:$0xff] %vm522, %v511
    %524 = vst.msk [vmem:[#allocation2 + $0x8] sm:$0xff] %vm522, %v513
    %525 = vst.msk [vmem:[#allocation2 + $0x10] sm:$0xff] %vm522, %v515
    %526 = vst.msk [vmem:[#allocation2 + $0x18] sm:$0xff] %vm522, %v517
    %v527 = vmax.f32 %v460, 0.0
    %v528 = vmax.f32 %v461, 0.0
    %v529 = vmax.f32 %v462, 0.0
    %v530 = vmax.f32 %v463, 0.0
    %v531 = vsel %vm127, %v527, -inf
    %v532 = vsel %vm127, %v528, -inf
    %v533 = vmax.f32 %v531, %v532
    %v534 = vrot.slane %v533, 4
    %v535 = vmax.f32 %v533, %v534
    %v536 = vrot.slane %v535, 2
    %v537 = vmax.f32 %v535, %v536
    %v538 = vrot.slane %v537, 1
    %v539 = vmax.f32 %v537, %v538
    %v540 = vsel %vm127, %v529, -inf
    %v541 = vsel %vm127, %v530, -inf
    %v542 = vmax.f32 %v540, %v541
    %v543 = vrot.slane %v542, 4
    %v544 = vmax.f32 %v542, %v543
    %v545 = vrot.slane %v544, 2
    %v546 = vmax.f32 %v544, %v545
    %v547 = vrot.slane %v546, 1
    %v548 = vmax.f32 %v546, %v547
    %v551 = vsel %vm204, %v548, %v539
    %552 = vrot.lane.b32.xlu0 %v551, 4
    %v553 = vpop.permute.xlu0 %552
    %vm555 = vcmask 58400
    %556 = vst.msk [vmem:[#allocation3] sm:$0x3] %vm555, %v553
    %v557 = vld [vmem:[%s1 + $0x1] sm:$0x1]
    %v558 = vld [vmem:[%s2 + $0x1] sm:$0x1]
    %v559 = vld [vmem:[#allocation2] sm:$0xff]
    %v560 = vld [vmem:[#allocation2 + $0x8] sm:$0xff]
    %v561 = vld [vmem:[#allocation2 + $0x10] sm:$0xff]
    %v562 = vld [vmem:[#allocation2 + $0x18] sm:$0xff]
    %v563 = vlaneseq
    %v564 = vshrl.u32 %v563, 7
    %v565 = vsub.s32 0, %v564
    %v566 = vrot.slane %v557, %v565
    %v567 = vmul.f32 %v559, %v566
    %v568 = vmul.f32 %v560, %v566
    %v569 = vmul.f32 %v561, %v566
    %v570 = vmul.f32 %v562, %v566
    %v571 = vlaneseq
    %v572 = vshrl.u32 %v571, 7
    %v573 = vsub.s32 0, %v572
    %v574 = vrot.slane %v558, %v573
    %v575 = vadd.f32 %v567, %v574
    %v576 = vadd.f32 %v568, %v574
    %v577 = vadd.f32 %v569, %v574
    %v578 = vadd.f32 %v570, %v574
    %v579 = vmax.f32 %v575, 0.0
    %v580 = vmax.f32 %v576, 0.0
    %v581 = vmax.f32 %v577, 0.0
    %v582 = vmax.f32 %v578, 0.0
    %v583 = vpack.c.bf16 %v580, %v579
    %v584 = vpack.c.bf16 %v582, %v581
    %s585 = scalar_lea.vmem %s3, 24
    %v586 = vld [vmem:[%s585] sm:$0xf]
    %v587 = vld [vmem:[%s585 + $0x4] sm:$0xf]
    %v590 = vunpack.c.l.b16 %v586
    %v591 = vunpack.c.l.b16 %v587
    %v592 = vpack.c.b16 %v591, %v590
    %v595 = vsel %vm245, %v583, 0
    %v598 = vsel %vm245, %v584, 0
    %600 = vmatprep.subr.bf16.mxu0 0
    %601 = vmatpush1.bf16.msra.mxu0 0
    %602 = vmatprep.subr.bf16.mxu0 0
    %603 = vmatpush1.bf16.msra.mxu0 0
    %604 = vmatprep.subr.bf16.mxu0 0
    %605 = vmatpush1.bf16.msra.mxu0 0
    %606 = vmatprep.subr.bf16.mxu0 0
    %607 = vmatpush1.bf16.msra.mxu0 0
    %608 = vmatprep.subr.bf16.mxu0 0
    %609 = vmatpush1.bf16.msra.mxu0 0
    %610 = vmatprep.subr.bf16.mxu0 0
    %611 = vmatpush1.bf16.msra.mxu0 0
    %612 = vmatprep.subr.bf16.mxu0 0
    %613 = vmatpush1.bf16.msra.mxu0 0
    %614 = vmatprep.subr.bf16.mxu0 0
    %615 = vmatpush1.bf16.msra.mxu0 %v592
    %616 = vmatprep.subr.bf16.mxu0 0
    %617 = vmatpush2.bf16.msra.mxu0 0
    %618 = vmatprep.subr.bf16.mxu0 0
    %619 = vmatpush2.bf16.msra.mxu0 0
    %620 = vmatprep.subr.bf16.mxu0 0
    %621 = vmatpush2.bf16.msra.mxu0 0
    %622 = vmatprep.subr.bf16.mxu0 0
    %623 = vmatpush2.bf16.msra.mxu0 0
    %624 = vmatprep.subr.bf16.mxu0 0
    %625 = vmatpush2.bf16.msra.mxu0 0
    %626 = vmatprep.subr.bf16.mxu0 0
    %627 = vmatpush2.bf16.msra.mxu0 0
    %628 = vmatprep.subr.bf16.mxu0 0
    %629 = vmatpush2.bf16.msra.mxu0 0
    %630 = vmatprep.subr.bf16.mxu0 0
    %631 = vmatpush2.bf16.msra.mxu0 0
    %632 = vmatprep.mubr.bf16.mxu0 0
    %633 = vmatmul.mubr.bf16.gmra.mxu0 %v595
    %v634 = vpop.f32.mrf.mxu0
    %v635 = vadd.f32 0.0, %v634
    %v636 = vpop.f32.mrf.mxu0
    %v637 = vpop.f32.mrf.mxu0
    %v638 = vadd.f32 0.0, %v637
    %v639 = vpop.f32.mrf.mxu0
    %640 = vmatprep.mubr.bf16.mxu0 0
    %641 = vmatmul.mubr.bf16.gmra.mxu0 %v598
    %v642 = vpop.f32.mrf.mxu0
    %v643 = vadd.f32 0.0, %v642
    %v644 = vpop.f32.mrf.mxu0
    %v645 = vpop.f32.mrf.mxu0
    %v646 = vadd.f32 0.0, %v645
    %v647 = vpop.f32.mrf.mxu0
    %648 = vdwg.mxu0
    %v649 = vrot.slane %v635, 7
    %v650 = vrot.slane %v638, 7
    %v651 = vrot.slane %v643, 7
    %v652 = vrot.slane %v646, 7
    %v653 = vsel %vm305, %v651, %v652
    %v654 = vsel %vm305, %v650, %v651
    %v655 = vsel %vm305, %v649, %v650
    %v656 = vsel %vm305, %v652, %v649
    %v657 = vmul.f32 %v656, %v95
    %v658 = vmul.f32 %v655, %v96
    %v659 = vmul.f32 %v654, %v97
    %v660 = vmul.f32 %v653, %v98
    %v661 = vadd.f32 %v657, 0.0
    %v662 = vadd.f32 %v658, 0.0
    %v663 = vadd.f32 %v659, 0.0
    %v664 = vadd.f32 %v660, 0.0
    %s665 = scalar_lea.vmem %s3, 32
    %v666 = vld [vmem:[%s665] sm:$0xf]
    %v667 = vld [vmem:[%s665 + $0x4] sm:$0xf]
    %v670 = vunpack.c.l.b16 %v666
    %v671 = vunpack.c.l.b16 %v667
    %v672 = vpack.c.b16 %v671, %v670
    %674 = vmatprep.subr.bf16.mxu0 0
    %675 = vmatpush1.bf16.msra.mxu0 0
    %676 = vmatprep.subr.bf16.mxu0 0
    %677 = vmatpush1.bf16.msra.mxu0 0
    %678 = vmatprep.subr.bf16.mxu0 0
    %679 = vmatpush1.bf16.msra.mxu0 0
    %680 = vmatprep.subr.bf16.mxu0 0
    %681 = vmatpush1.bf16.msra.mxu0 0
    %682 = vmatprep.subr.bf16.mxu0 0
    %683 = vmatpush1.bf16.msra.mxu0 0
    %684 = vmatprep.subr.bf16.mxu0 0
    %685 = vmatpush1.bf16.msra.mxu0 0
    %686 = vmatprep.subr.bf16.mxu0 0
    %687 = vmatpush1.bf16.msra.mxu0 0
    %688 = vmatprep.subr.bf16.mxu0 0
    %689 = vmatpush1.bf16.msra.mxu0 %v672
    %690 = vmatprep.subr.bf16.mxu0 0
    %691 = vmatpush2.bf16.msra.mxu0 0
    %692 = vmatprep.subr.bf16.mxu0 0
    %693 = vmatpush2.bf16.msra.mxu0 0
    %694 = vmatprep.subr.bf16.mxu0 0
    %695 = vmatpush2.bf16.msra.mxu0 0
    %696 = vmatprep.subr.bf16.mxu0 0
    %697 = vmatpush2.bf16.msra.mxu0 0
    %698 = vmatprep.subr.bf16.mxu0 0
    %699 = vmatpush2.bf16.msra.mxu0 0
    %700 = vmatprep.subr.bf16.mxu0 0
    %701 = vmatpush2.bf16.msra.mxu0 0
    %702 = vmatprep.subr.bf16.mxu0 0
    %703 = vmatpush2.bf16.msra.mxu0 0
    %704 = vmatprep.subr.bf16.mxu0 0
    %705 = vmatpush2.bf16.msra.mxu0 0
    %706 = vmatprep.mubr.bf16.mxu0 0
    %707 = vmatmul.mubr.bf16.gmra.mxu0 %v595
    %v708 = vpop.f32.mrf.mxu0
    %v709 = vadd.f32 0.0, %v708
    %v710 = vpop.f32.mrf.mxu0
    %v711 = vpop.f32.mrf.mxu0
    %v712 = vadd.f32 0.0, %v711
    %v713 = vpop.f32.mrf.mxu0
    %714 = vmatprep.mubr.bf16.mxu0 0
    %715 = vmatmul.mubr.bf16.gmra.mxu0 %v598
    %v716 = vpop.f32.mrf.mxu0
    %v717 = vadd.f32 0.0, %v716
    %v718 = vpop.f32.mrf.mxu0
    %v719 = vpop.f32.mrf.mxu0
    %v720 = vadd.f32 0.0, %v719
    %v721 = vpop.f32.mrf.mxu0
    %722 = vdwg.mxu0
    %v723 = vadd.f32 %v661, %v709
    %v724 = vadd.f32 %v662, %v712
    %v725 = vadd.f32 %v663, %v717
    %v726 = vadd.f32 %v664, %v720
    %s727 = scalar_lea.vmem %s3, 40
    %v728 = vld [vmem:[%s727] sm:$0xf]
    %v729 = vld [vmem:[%s727 + $0x4] sm:$0xf]
    %v732 = vunpack.c.l.b16 %v728
    %v733 = vunpack.c.l.b16 %v729
    %v734 = vpack.c.b16 %v733, %v732
    %736 = vmatprep.subr.bf16.mxu0 0
    %737 = vmatpush1.bf16.msra.mxu0 0
    %738 = vmatprep.subr.bf16.mxu0 0
    %739 = vmatpush1.bf16.msra.mxu0 0
    %740 = vmatprep.subr.bf16.mxu0 0
    %741 = vmatpush1.bf16.msra.mxu0 0
    %742 = vmatprep.subr.bf16.mxu0 0
    %743 = vmatpush1.bf16.msra.mxu0 0
    %744 = vmatprep.subr.bf16.mxu0 0
    %745 = vmatpush1.bf16.msra.mxu0 0
    %746 = vmatprep.subr.bf16.mxu0 0
    %747 = vmatpush1.bf16.msra.mxu0 0
    %748 = vmatprep.subr.bf16.mxu0 0
    %749 = vmatpush1.bf16.msra.mxu0 0
    %750 = vmatprep.subr.bf16.mxu0 0
    %751 = vmatpush1.bf16.msra.mxu0 %v734
    %752 = vmatprep.subr.bf16.mxu0 0
    %753 = vmatpush2.bf16.msra.mxu0 0
    %754 = vmatprep.subr.bf16.mxu0 0
    %755 = vmatpush2.bf16.msra.mxu0 0
    %756 = vmatprep.subr.bf16.mxu0 0
    %757 = vmatpush2.bf16.msra.mxu0 0
    %758 = vmatprep.subr.bf16.mxu0 0
    %759 = vmatpush2.bf16.msra.mxu0 0
    %760 = vmatprep.subr.bf16.mxu0 0
    %761 = vmatpush2.bf16.msra.mxu0 0
    %762 = vmatprep.subr.bf16.mxu0 0
    %763 = vmatpush2.bf16.msra.mxu0 0
    %764 = vmatprep.subr.bf16.mxu0 0
    %765 = vmatpush2.bf16.msra.mxu0 0
    %766 = vmatprep.subr.bf16.mxu0 0
    %767 = vmatpush2.bf16.msra.mxu0 0
    %768 = vmatprep.mubr.bf16.mxu0 0
    %769 = vmatmul.mubr.bf16.gmra.mxu0 %v595
    %v770 = vpop.f32.mrf.mxu0
    %v771 = vadd.f32 0.0, %v770
    %v772 = vpop.f32.mrf.mxu0
    %v773 = vpop.f32.mrf.mxu0
    %v774 = vadd.f32 0.0, %v773
    %v775 = vpop.f32.mrf.mxu0
    %776 = vmatprep.mubr.bf16.mxu0 0
    %777 = vmatmul.mubr.bf16.gmra.mxu0 %v598
    %v778 = vpop.f32.mrf.mxu0
    %v779 = vadd.f32 0.0, %v778
    %v780 = vpop.f32.mrf.mxu0
    %v781 = vpop.f32.mrf.mxu0
    %v782 = vadd.f32 0.0, %v781
    %v783 = vpop.f32.mrf.mxu0
    %784 = vdwg.mxu0
    %v785 = vrot.slane %v771, 1
    %v786 = vrot.slane %v774, 1
    %v787 = vrot.slane %v779, 1
    %v788 = vrot.slane %v782, 1
    %v789 = vsel %vm442, %v787, %v788
    %v790 = vsel %vm442, %v786, %v787
    %v791 = vsel %vm442, %v785, %v786
    %v792 = vsel %vm442, %v788, %v785
    %v793 = vmul.f32 %v791, %v119
    %v794 = vmul.f32 %v790, %v120
    %v795 = vmul.f32 %v789, %v121
    %v796 = vmul.f32 %v792, %v122
    %v797 = vadd.f32 %v723, %v793
    %v798 = vadd.f32 %v724, %v794
    %v799 = vadd.f32 %v725, %v795
    %v800 = vadd.f32 %v726, %v796
    %v801 = vld [vmem:[%s4 + $0x1] sm:$0x1]
    %v802 = vlaneseq
    %v803 = vshrl.u32 %v802, 7
    %v804 = vsub.s32 0, %v803
    %v805 = vrot.slane %v801, %v804
    %v806 = vadd.f32 %v797, %v805
    %v807 = vadd.f32 %v798, %v805
    %v808 = vadd.f32 %v799, %v805
    %v809 = vadd.f32 %v800, %v805
    %v810 = vsel %vm127, %v806, 0.0
    %v811 = vsel %vm127, %v807, 0.0
    %v812 = vadd.f32 %v810, %v811
    %v813 = vsel %vm127, %v808, 0.0
    %v814 = vadd.f32 %v812, %v813
    %v815 = vsel %vm127, %v809, 0.0
    %v816 = vadd.f32 %v814, %v815
    %v817 = vrot.slane %v816, 4
    %v818 = vadd.f32 %v816, %v817
    %v819 = vrot.slane %v818, 2
    %v820 = vadd.f32 %v818, %v819
    %v821 = vrot.slane %v820, 1
    %v822 = vadd.f32 %v820, %v821
    %v823 = vmul.f32 %v822, %v141
    %v824 = vsub.f32 %v806, %v823
    %v825 = vsub.f32 %v807, %v823
    %v826 = vsub.f32 %v808, %v823
    %v827 = vsub.f32 %v809, %v823
    %v828 = vmul.f32 %v824, %v824
    %v829 = vmul.f32 %v825, %v825
    %v830 = vmul.f32 %v826, %v826
    %v831 = vmul.f32 %v827, %v827
    %v832 = vsel %vm127, %v828, 0.0
    %v833 = vsel %vm127, %v829, 0.0
    %v834 = vadd.f32 %v832, %v833
    %v835 = vsel %vm127, %v830, 0.0
    %v836 = vadd.f32 %v834, %v835
    %v837 = vsel %vm127, %v831, 0.0
    %v838 = vadd.f32 %v836, %v837
    %v839 = vrot.slane %v838, 4
    %v840 = vadd.f32 %v838, %v839
    %v841 = vrot.slane %v840, 2
    %v842 = vadd.f32 %v840, %v841
    %v843 = vrot.slane %v842, 1
    %v844 = vadd.f32 %v842, %v843
    %v845 = vmul.f32 %v844, %v141
    %v846 = vadd.f32 %v845, 1e-05
    %v847 = vrsqrt.pop %v846
    %v848 = vmul.f32 %v824, %v847
    %v849 = vmul.f32 %v825, %v847
    %v850 = vmul.f32 %v826, %v847
    %v851 = vmul.f32 %v827, %v847
    %856 = vrot.lane.b32.xlu0 %v848, 8
    %v857 = vpop.permute.xlu0 %856
    %858 = vrot.lane.b32.xlu0 %v849, 8
    %v859 = vpop.permute.xlu0 %858
    %860 = vrot.lane.b32.xlu0 %v850, 8
    %v861 = vpop.permute.xlu0 %860
    %862 = vrot.lane.b32.xlu0 %v851, 8
    %v863 = vpop.permute.xlu0 %862
    %vm868 = vcmask 97344
    %869 = vst.msk [vmem:[#allocation2] sm:$0xff] %vm868, %v857
    %870 = vst.msk [vmem:[#allocation2 + $0x8] sm:$0xff] %vm868, %v859
    %871 = vst.msk [vmem:[#allocation2 + $0x10] sm:$0xff] %vm868, %v861
    %872 = vst.msk [vmem:[#allocation2 + $0x18] sm:$0xff] %vm868, %v863
    %v873 = vmax.f32 %v806, 0.0
    %v874 = vmax.f32 %v807, 0.0
    %v875 = vmax.f32 %v808, 0.0
    %v876 = vmax.f32 %v809, 0.0
    %v877 = vsel %vm127, %v873, -inf
    %v878 = vsel %vm127, %v874, -inf
    %v879 = vmax.f32 %v877, %v878
    %v880 = vrot.slane %v879, 4
    %v881 = vmax.f32 %v879, %v880
    %v882 = vrot.slane %v881, 2
    %v883 = vmax.f32 %v881, %v882
    %v884 = vrot.slane %v883, 1
    %v885 = vmax.f32 %v883, %v884
    %v886 = vsel %vm127, %v875, -inf
    %v887 = vsel %vm127, %v876, -inf
    %v888 = vmax.f32 %v886, %v887
    %v889 = vrot.slane %v888, 4
    %v890 = vmax.f32 %v888, %v889
    %v891 = vrot.slane %v890, 2
    %v892 = vmax.f32 %v890, %v891
    %v893 = vrot.slane %v892, 1
    %v894 = vmax.f32 %v892, %v893
    %v897 = vsel %vm204, %v894, %v885
    %898 = vrot.lane.b32.xlu0 %v897, 8
    %v899 = vpop.permute.xlu0 %898
    %vm901 = vcmask 91200
    %902 = vst.msk [vmem:[#allocation3] sm:$0x3] %vm901, %v899
    %v903 = vld [vmem:[%s1 + $0x2] sm:$0x1]
    %v904 = vld [vmem:[%s2 + $0x2] sm:$0x1]
    %v905 = vld [vmem:[#allocation2] sm:$0xff]
    %v906 = vld [vmem:[#allocation2 + $0x8] sm:$0xff]
    %v907 = vld [vmem:[#allocation2 + $0x10] sm:$0xff]
    %v908 = vld [vmem:[#allocation2 + $0x18] sm:$0xff]
    %v909 = vlaneseq
    %v910 = vshrl.u32 %v909, 7
    %v911 = vsub.s32 0, %v910
    %v912 = vrot.slane %v903, %v911
    %v913 = vmul.f32 %v905, %v912
    %v914 = vmul.f32 %v906, %v912
    %v915 = vmul.f32 %v907, %v912
    %v916 = vmul.f32 %v908, %v912
    %v917 = vlaneseq
    %v918 = vshrl.u32 %v917, 7
    %v919 = vsub.s32 0, %v918
    %v920 = vrot.slane %v904, %v919
    %v921 = vadd.f32 %v913, %v920
    %v922 = vadd.f32 %v914, %v920
    %v923 = vadd.f32 %v915, %v920
    %v924 = vadd.f32 %v916, %v920
    %v925 = vmax.f32 %v921, 0.0
    %v926 = vmax.f32 %v922, 0.0
    %v927 = vmax.f32 %v923, 0.0
    %v928 = vmax.f32 %v924, 0.0
    %v929 = vpack.c.bf16 %v926, %v925
    %v930 = vpack.c.bf16 %v928, %v927
    %s931 = scalar_lea.vmem %s3, 48
    %v932 = vld [vmem:[%s931] sm:$0xf]
    %v933 = vld [vmem:[%s931 + $0x4] sm:$0xf]
    %v936 = vunpack.c.l.b16 %v932
    %v937 = vunpack.c.l.b16 %v933
    %v938 = vpack.c.b16 %v937, %v936
    %v941 = vsel %vm245, %v929, 0
    %v944 = vsel %vm245, %v930, 0
    %946 = vmatprep.subr.bf16.mxu0 0
    %947 = vmatpush1.bf16.msra.mxu0 0
    %948 = vmatprep.subr.bf16.mxu0 0
    %949 = vmatpush1.bf16.msra.mxu0 0
    %950 = vmatprep.subr.bf16.mxu0 0
    %951 = vmatpush1.bf16.msra.mxu0 0
    %952 = vmatprep.subr.bf16.mxu0 0
    %953 = vmatpush1.bf16.msra.mxu0 0
    %954 = vmatprep.subr.bf16.mxu0 0
    %955 = vmatpush1.bf16.msra.mxu0 0
    %956 = vmatprep.subr.bf16.mxu0 0
    %957 = vmatpush1.bf16.msra.mxu0 0
    %958 = vmatprep.subr.bf16.mxu0 0
    %959 = vmatpush1.bf16.msra.mxu0 0
    %960 = vmatprep.subr.bf16.mxu0 0
    %961 = vmatpush1.bf16.msra.mxu0 %v938
    %962 = vmatprep.subr.bf16.mxu0 0
    %963 = vmatpush2.bf16.msra.mxu0 0
    %964 = vmatprep.subr.bf16.mxu0 0
    %965 = vmatpush2.bf16.msra.mxu0 0
    %966 = vmatprep.subr.bf16.mxu0 0
    %967 = vmatpush2.bf16.msra.mxu0 0
    %968 = vmatprep.subr.bf16.mxu0 0
    %969 = vmatpush2.bf16.msra.mxu0 0
    %970 = vmatprep.subr.bf16.mxu0 0
    %971 = vmatpush2.bf16.msra.mxu0 0
    %972 = vmatprep.subr.bf16.mxu0 0
    %973 = vmatpush2.bf16.msra.mxu0 0
    %974 = vmatprep.subr.bf16.mxu0 0
    %975 = vmatpush2.bf16.msra.mxu0 0
    %976 = vmatprep.subr.bf16.mxu0 0
    %977 = vmatpush2.bf16.msra.mxu0 0
    %978 = vmatprep.mubr.bf16.mxu0 0
    %979 = vmatmul.mubr.bf16.gmra.mxu0 %v941
    %v980 = vpop.f32.mrf.mxu0
    %v981 = vadd.f32 0.0, %v980
    %v982 = vpop.f32.mrf.mxu0
    %v983 = vpop.f32.mrf.mxu0
    %v984 = vadd.f32 0.0, %v983
    %v985 = vpop.f32.mrf.mxu0
    %986 = vmatprep.mubr.bf16.mxu0 0
    %987 = vmatmul.mubr.bf16.gmra.mxu0 %v944
    %v988 = vpop.f32.mrf.mxu0
    %v989 = vadd.f32 0.0, %v988
    %v990 = vpop.f32.mrf.mxu0
    %v991 = vpop.f32.mrf.mxu0
    %v992 = vadd.f32 0.0, %v991
    %v993 = vpop.f32.mrf.mxu0
    %994 = vdwg.mxu0
    %v995 = vrot.slane %v981, 7
    %v996 = vrot.slane %v984, 7
    %v997 = vrot.slane %v989, 7
    %v998 = vrot.slane %v992, 7
    %v999 = vsel %vm305, %v997, %v998
    %v1000 = vsel %vm305, %v996, %v997
    %v1001 = vsel %vm305, %v995, %v996
    %v1002 = vsel %vm305, %v998, %v995
    %v1003 = vmul.f32 %v1002, %v95
    %v1004 = vmul.f32 %v1001, %v96
    %v1005 = vmul.f32 %v1000, %v97
    %v1006 = vmul.f32 %v999, %v98
    %v1007 = vadd.f32 %v1003, 0.0
    %v1008 = vadd.f32 %v1004, 0.0
    %v1009 = vadd.f32 %v1005, 0.0
    %v1010 = vadd.f32 %v1006, 0.0
    %s1011 = scalar_lea.vmem %s3, 56
    %v1012 = vld [vmem:[%s1011] sm:$0xf]
    %v1013 = vld [vmem:[%s1011 + $0x4] sm:$0xf]
    %v1016 = vunpack.c.l.b16 %v1012
    %v1017 = vunpack.c.l.b16 %v1013
    %v1018 = vpack.c.b16 %v1017, %v1016
    %1020 = vmatprep.subr.bf16.mxu0 0
    %1021 = vmatpush1.bf16.msra.mxu0 0
    %1022 = vmatprep.subr.bf16.mxu0 0
    %1023 = vmatpush1.bf16.msra.mxu0 0
    %1024 = vmatprep.subr.bf16.mxu0 0
    %1025 = vmatpush1.bf16.msra.mxu0 0
    %1026 = vmatprep.subr.bf16.mxu0 0
    %1027 = vmatpush1.bf16.msra.mxu0 0
    %1028 = vmatprep.subr.bf16.mxu0 0
    %1029 = vmatpush1.bf16.msra.mxu0 0
    %1030 = vmatprep.subr.bf16.mxu0 0
    %1031 = vmatpush1.bf16.msra.mxu0 0
    %1032 = vmatprep.subr.bf16.mxu0 0
    %1033 = vmatpush1.bf16.msra.mxu0 0
    %1034 = vmatprep.subr.bf16.mxu0 0
    %1035 = vmatpush1.bf16.msra.mxu0 %v1018
    %1036 = vmatprep.subr.bf16.mxu0 0
    %1037 = vmatpush2.bf16.msra.mxu0 0
    %1038 = vmatprep.subr.bf16.mxu0 0
    %1039 = vmatpush2.bf16.msra.mxu0 0
    %1040 = vmatprep.subr.bf16.mxu0 0
    %1041 = vmatpush2.bf16.msra.mxu0 0
    %1042 = vmatprep.subr.bf16.mxu0 0
    %1043 = vmatpush2.bf16.msra.mxu0 0
    %1044 = vmatprep.subr.bf16.mxu0 0
    %1045 = vmatpush2.bf16.msra.mxu0 0
    %1046 = vmatprep.subr.bf16.mxu0 0
    %1047 = vmatpush2.bf16.msra.mxu0 0
    %1048 = vmatprep.subr.bf16.mxu0 0
    %1049 = vmatpush2.bf16.msra.mxu0 0
    %1050 = vmatprep.subr.bf16.mxu0 0
    %1051 = vmatpush2.bf16.msra.mxu0 0
    %1052 = vmatprep.mubr.bf16.mxu0 0
    %1053 = vmatmul.mubr.bf16.gmra.mxu0 %v941
    %v1054 = vpop.f32.mrf.mxu0
    %v1055 = vadd.f32 0.0, %v1054
    %v1056 = vpop.f32.mrf.mxu0
    %v1057 = vpop.f32.mrf.mxu0
    %v1058 = vadd.f32 0.0, %v1057
    %v1059 = vpop.f32.mrf.mxu0
    %1060 = vmatprep.mubr.bf16.mxu0 0
    %1061 = vmatmul.mubr.bf16.gmra.mxu0 %v944
    %v1062 = vpop.f32.mrf.mxu0
    %v1063 = vadd.f32 0.0, %v1062
    %v1064 = vpop.f32.mrf.mxu0
    %v1065 = vpop.f32.mrf.mxu0
    %v1066 = vadd.f32 0.0, %v1065
    %v1067 = vpop.f32.mrf.mxu0
    %1068 = vdwg.mxu0
    %v1069 = vadd.f32 %v1007, %v1055
    %v1070 = vadd.f32 %v1008, %v1058
    %v1071 = vadd.f32 %v1009, %v1063
    %v1072 = vadd.f32 %v1010, %v1066
    %s1073 = scalar_lea.vmem %s3, 64
    %v1074 = vld [vmem:[%s1073] sm:$0xf]
    %v1075 = vld [vmem:[%s1073 + $0x4] sm:$0xf]
    %v1078 = vunpack.c.l.b16 %v1074
    %v1079 = vunpack.c.l.b16 %v1075
    %v1080 = vpack.c.b16 %v1079, %v1078
    %1082 = vmatprep.subr.bf16.mxu0 0
    %1083 = vmatpush1.bf16.msra.mxu0 0
    %1084 = vmatprep.subr.bf16.mxu0 0
    %1085 = vmatpush1.bf16.msra.mxu0 0
    %1086 = vmatprep.subr.bf16.mxu0 0
    %1087 = vmatpush1.bf16.msra.mxu0 0
    %1088 = vmatprep.subr.bf16.mxu0 0
    %1089 = vmatpush1.bf16.msra.mxu0 0
    %1090 = vmatprep.subr.bf16.mxu0 0
    %1091 = vmatpush1.bf16.msra.mxu0 0
    %1092 = vmatprep.subr.bf16.mxu0 0
    %1093 = vmatpush1.bf16.msra.mxu0 0
    %1094 = vmatprep.subr.bf16.mxu0 0
    %1095 = vmatpush1.bf16.msra.mxu0 0
    %1096 = vmatprep.subr.bf16.mxu0 0
    %1097 = vmatpush1.bf16.msra.mxu0 %v1080
    %1098 = vmatprep.subr.bf16.mxu0 0
    %1099 = vmatpush2.bf16.msra.mxu0 0
    %1100 = vmatprep.subr.bf16.mxu0 0
    %1101 = vmatpush2.bf16.msra.mxu0 0
    %1102 = vmatprep.subr.bf16.mxu0 0
    %1103 = vmatpush2.bf16.msra.mxu0 0
    %1104 = vmatprep.subr.bf16.mxu0 0
    %1105 = vmatpush2.bf16.msra.mxu0 0
    %1106 = vmatprep.subr.bf16.mxu0 0
    %1107 = vmatpush2.bf16.msra.mxu0 0
    %1108 = vmatprep.subr.bf16.mxu0 0
    %1109 = vmatpush2.bf16.msra.mxu0 0
    %1110 = vmatprep.subr.bf16.mxu0 0
    %1111 = vmatpush2.bf16.msra.mxu0 0
    %1112 = vmatprep.subr.bf16.mxu0 0
    %1113 = vmatpush2.bf16.msra.mxu0 0
    %1114 = vmatprep.mubr.bf16.mxu0 0
    %1115 = vmatmul.mubr.bf16.gmra.mxu0 %v941
    %v1116 = vpop.f32.mrf.mxu0
    %v1117 = vadd.f32 0.0, %v1116
    %v1118 = vpop.f32.mrf.mxu0
    %v1119 = vpop.f32.mrf.mxu0
    %v1120 = vadd.f32 0.0, %v1119
    %v1121 = vpop.f32.mrf.mxu0
    %1122 = vmatprep.mubr.bf16.mxu0 0
    %1123 = vmatmul.mubr.bf16.gmra.mxu0 %v944
    %v1124 = vpop.f32.mrf.mxu0
    %v1125 = vadd.f32 0.0, %v1124
    %v1126 = vpop.f32.mrf.mxu0
    %v1127 = vpop.f32.mrf.mxu0
    %v1128 = vadd.f32 0.0, %v1127
    %v1129 = vpop.f32.mrf.mxu0
    %1130 = vdwg.mxu0
    %v1131 = vrot.slane %v1117, 1
    %v1132 = vrot.slane %v1120, 1
    %v1133 = vrot.slane %v1125, 1
    %v1134 = vrot.slane %v1128, 1
    %v1135 = vsel %vm442, %v1133, %v1134
    %v1136 = vsel %vm442, %v1132, %v1133
    %v1137 = vsel %vm442, %v1131, %v1132
    %v1138 = vsel %vm442, %v1134, %v1131
    %v1139 = vmul.f32 %v1137, %v119
    %v1140 = vmul.f32 %v1136, %v120
    %v1141 = vmul.f32 %v1135, %v121
    %v1142 = vmul.f32 %v1138, %v122
    %v1143 = vadd.f32 %v1069, %v1139
    %v1144 = vadd.f32 %v1070, %v1140
    %v1145 = vadd.f32 %v1071, %v1141
    %v1146 = vadd.f32 %v1072, %v1142
    %v1147 = vld [vmem:[%s4 + $0x2] sm:$0x1]
    %v1148 = vlaneseq
    %v1149 = vshrl.u32 %v1148, 7
    %v1150 = vsub.s32 0, %v1149
    %v1151 = vrot.slane %v1147, %v1150
    %v1152 = vadd.f32 %v1143, %v1151
    %v1153 = vadd.f32 %v1144, %v1151
    %v1154 = vadd.f32 %v1145, %v1151
    %v1155 = vadd.f32 %v1146, %v1151
    %v1156 = vsel %vm127, %v1152, 0.0
    %v1157 = vsel %vm127, %v1153, 0.0
    %v1158 = vadd.f32 %v1156, %v1157
    %v1159 = vsel %vm127, %v1154, 0.0
    %v1160 = vadd.f32 %v1158, %v1159
    %v1161 = vsel %vm127, %v1155, 0.0
    %v1162 = vadd.f32 %v1160, %v1161
    %v1163 = vrot.slane %v1162, 4
    %v1164 = vadd.f32 %v1162, %v1163
    %v1165 = vrot.slane %v1164, 2
    %v1166 = vadd.f32 %v1164, %v1165
    %v1167 = vrot.slane %v1166, 1
    %v1168 = vadd.f32 %v1166, %v1167
    %v1169 = vmul.f32 %v1168, %v141
    %v1170 = vsub.f32 %v1152, %v1169
    %v1171 = vsub.f32 %v1153, %v1169
    %v1172 = vsub.f32 %v1154, %v1169
    %v1173 = vsub.f32 %v1155, %v1169
    %v1174 = vmul.f32 %v1170, %v1170
    %v1175 = vmul.f32 %v1171, %v1171
    %v1176 = vmul.f32 %v1172, %v1172
    %v1177 = vmul.f32 %v1173, %v1173
    %v1178 = vsel %vm127, %v1174, 0.0
    %v1179 = vsel %vm127, %v1175, 0.0
    %v1180 = vadd.f32 %v1178, %v1179
    %v1181 = vsel %vm127, %v1176, 0.0
    %v1182 = vadd.f32 %v1180, %v1181
    %v1183 = vsel %vm127, %v1177, 0.0
    %v1184 = vadd.f32 %v1182, %v1183
    %v1185 = vrot.slane %v1184, 4
    %v1186 = vadd.f32 %v1184, %v1185
    %v1187 = vrot.slane %v1186, 2
    %v1188 = vadd.f32 %v1186, %v1187
    %v1189 = vrot.slane %v1188, 1
    %v1190 = vadd.f32 %v1188, %v1189
    %v1191 = vmul.f32 %v1190, %v141
    %v1192 = vadd.f32 %v1191, 1e-05
    %v1193 = vrsqrt.pop %v1192
    %v1194 = vmul.f32 %v1170, %v1193
    %v1195 = vmul.f32 %v1171, %v1193
    %v1196 = vmul.f32 %v1172, %v1193
    %v1197 = vmul.f32 %v1173, %v1193
    %1202 = vrot.lane.b32.xlu0 %v1194, 12
    %v1203 = vpop.permute.xlu0 %1202
    %1204 = vrot.lane.b32.xlu0 %v1195, 12
    %v1205 = vpop.permute.xlu0 %1204
    %1206 = vrot.lane.b32.xlu0 %v1196, 12
    %v1207 = vpop.permute.xlu0 %1206
    %1208 = vrot.lane.b32.xlu0 %v1197, 12
    %v1209 = vpop.permute.xlu0 %1208
    %vm1214 = vcmask 130144
    %1215 = vst.msk [vmem:[#allocation2] sm:$0xff] %vm1214, %v1203
    %1216 = vst.msk [vmem:[#allocation2 + $0x8] sm:$0xff] %vm1214, %v1205
    %1217 = vst.msk [vmem:[#allocation2 + $0x10] sm:$0xff] %vm1214, %v1207
    %1218 = vst.msk [vmem:[#allocation2 + $0x18] sm:$0xff] %vm1214, %v1209
    %v1219 = vmax.f32 %v1152, 0.0
    %v1220 = vmax.f32 %v1153, 0.0
    %v1221 = vmax.f32 %v1154, 0.0
    %v1222 = vmax.f32 %v1155, 0.0
    %v1223 = vsel %vm127, %v1219, -inf
    %v1224 = vsel %vm127, %v1220, -inf
    %v1225 = vmax.f32 %v1223, %v1224
    %v1226 = vrot.slane %v1225, 4
    %v1227 = vmax.f32 %v1225, %v1226
    %v1228 = vrot.slane %v1227, 2
    %v1229 = vmax.f32 %v1227, %v1228
    %v1230 = vrot.slane %v1229, 1
    %v1231 = vmax.f32 %v1229, %v1230
    %v1232 = vsel %vm127, %v1221, -inf
    %v1233 = vsel %vm127, %v1222, -inf
    %v1234 = vmax.f32 %v1232, %v1233
    %v1235 = vrot.slane %v1234, 4
    %v1236 = vmax.f32 %v1234, %v1235
    %v1237 = vrot.slane %v1236, 2
    %v1238 = vmax.f32 %v1236, %v1237
    %v1239 = vrot.slane %v1238, 1
    %v1240 = vmax.f32 %v1238, %v1239
    %v1243 = vsel %vm204, %v1240, %v1231
    %1244 = vrot.lane.b32.xlu0 %v1243, 12
    %v1245 = vpop.permute.xlu0 %1244
    %vm1247 = vcmask 124000
    %1248 = vst.msk [vmem:[#allocation3] sm:$0x3] %vm1247, %v1245
    // Predicated region
    $region22: #{tpu_custom_call.1} parent=1 // pred_check
      _
    $region23: #{tpu_custom_call.1} parent=1 // pred_check_branch
      %1250 = sbr.rel (0) target = $region25
    $region24: #{tpu_custom_call.1} parent=1 // pred_region
      %s1252 = ssub.s32 32, 32
      %1253 = vsyncadd [#allocation4], %s1252
      %s1255 = sshll.u32 [#allocation3], 4
      %s1256 = int_to_ptr.vmem [resolvable:$true] %s1255
      %1258 = dma.vmem_to_hbm [thread:$0]  %s1256, 32, %s5, [#allocation4]
    $region25: #{tpu_custom_call.1} parent=1 // pred_fallthru
      _
    // Predicated region
    $region26: #{tpu_custom_call.1} parent=1 // pred_check
      _
    $region27: #{tpu_custom_call.1} parent=1 // pred_check_branch
      %1260 = sbr.rel (0) target = $region29
    $region28: #{tpu_custom_call.1} parent=1 // pred_region
      %1261 = dma.done [#allocation4], 32
    $region29: #{tpu_custom_call.1} parent=1 // pred_fallthru
      _
    %1262 = vsyncpa [#allocation4], 1

</llo_original>
